<compile_context>
chip_gen: v5e
topology: v5e:2x2
jax: 0.10.0
libtpu: 0.0.40
codegen_flags: <defaults>
</compile_context>

<pallas_src>
import functools

import jax
import jax.numpy as jnp
from jax.experimental import pallas as pl
from jax.experimental.pallas import tpu as pltpu

_IMG_FEATURES = 1600   # 40 * 40 flattened image
_LANE = 128


def _leaky_relu(v, slope=0.01):
    return jnp.where(v >= 0, v, slope * v)


def _round_up(v, m):
    return ((v + m - 1) // m) * m


def receiver_kernel(img_ref, x_ref, w1_ref, b1_ref, w2_ref, b2_ref,
                    w3_ref, b3_ref, dots_ref):
    """One row-tile: 3-layer MLP (bf16 MXU, f32 accumulation) + per-row dot."""
    # layer 1: 1600 -> 400  (dominant FLOPs; f32 tile cast to bf16 in-kernel)
    a = jnp.dot(img_ref[...].astype(jnp.bfloat16), w1_ref[...],
                preferred_element_type=jnp.float32) + b1_ref[...]
    a = _leaky_relu(a)
    # layer 2: 400 -> 128   (100 zero-padded to a full lane tile; exact)
    a = jnp.dot(a.astype(jnp.bfloat16), w2_ref[...],
                preferred_element_type=jnp.float32) + b2_ref[...]
    a = _leaky_relu(a)
    # layer 3: 128 -> n_hidden
    a = jnp.dot(a.astype(jnp.bfloat16), w3_ref[...],
                preferred_element_type=jnp.float32) + b3_ref[...]
    a = jnp.tanh(a)                                            # (tile_n, H) f32

    # dots[n] = <a[n, :], x[n // game_size, :]>; x is pre-expanded to (tile_n, H).
    # Stored directly as a (tile_n, 1) column block — output is tiny, so the
    # masked single-lane stores are negligible and no transpose is needed.
    dots_ref[...] = jnp.sum(a * x_ref[...], axis=-1, keepdims=True)


def prepare_params(params):
    """Cast matmul weights to bf16; zero-pad the 100-wide layer to 128 lanes."""
    w1, b1, w2, b2, w3, b3 = params
    pad2 = (-w2.shape[1]) % _LANE          # 100 -> 128 (zero padding is exact)
    w2 = jnp.pad(w2, ((0, 0), (0, pad2)))
    b2 = jnp.pad(b2, ((0, 0), (0, pad2)))
    w3 = jnp.pad(w3, ((0, pad2), (0, 0)))
    return (w1.astype(jnp.bfloat16), b1.astype(jnp.float32),
            w2.astype(jnp.bfloat16), b2.astype(jnp.float32),
            w3.astype(jnp.bfloat16), b3.astype(jnp.float32))


@functools.partial(jax.jit, static_argnames=("game_size", "tile_n"))
def receiver_forward(x, image, params, *, game_size, tile_n=512):
    """x: (B, n_hidden) message; image: (num_graphs, 1, 40, 40) NCHW."""
    w1, b1, w2, b2, w3, b3 = prepare_params(params)
    num_graphs = image.shape[0]
    batch = num_graphs // game_size
    n_hidden = w3.shape[1]

    # Flatten NCHW -> (N, 1600); kept in f32 — the bf16 cast happens in-kernel
    # so the image crosses HBM exactly once.
    img = image.reshape(num_graphs, _IMG_FEATURES).astype(jnp.float32)
    # Expand the message so row n of x_rep is the message of game n // game_size.
    x_rep = jnp.repeat(x.astype(jnp.float32), game_size, axis=0)     # (N, H)

    # Row tiling: multiples of 8 sublanes; ensure >= 2 grid steps when there is
    # enough work so the "parallel" axis can shard across v7x TensorCores.
    n8 = _round_up(num_graphs, 8)
    tile_n = min(tile_n, n8)
    half = _round_up(pl.cdiv(n8, 2), 8)
    if n8 >= 16 and tile_n > half:
        tile_n = half
    n_pad = _round_up(n8, tile_n)
    num_tiles = n_pad // tile_n
    if n_pad != num_graphs:
        img = jnp.pad(img, ((0, n_pad - num_graphs), (0, 0)))
        x_rep = jnp.pad(x_rep, ((0, n_pad - num_graphs), (0, 0)))

    def row_spec(shape):
        return pl.BlockSpec(shape, lambda i: (i, 0))

    def const_spec(arr):                       # weights/biases stay VMEM-resident
        return pl.BlockSpec(arr.shape, lambda i: (0, 0))

    weight_bytes = sum(int(w.size) * w.dtype.itemsize
                       for w in (w1, b1, w2, b2, w3, b3))
    cost = pl.CostEstimate(
        flops=2 * n_pad * (_IMG_FEATURES * 400 + 400 * w2.shape[1]
                           + w2.shape[1] * n_hidden + n_hidden),
        transcendentals=n_pad * n_hidden,
        bytes_accessed=n_pad * (_IMG_FEATURES * 4 + n_hidden * 4 + 4)
                       + weight_bytes,
    )

    dots_col = pl.pallas_call(
        receiver_kernel,
        out_shape=jax.ShapeDtypeStruct((n_pad, 1), jnp.float32),
        grid=(num_tiles,),
        in_specs=[
            row_spec((tile_n, _IMG_FEATURES)),   # image tile (double-buffered)
            row_spec((tile_n, n_hidden)),        # expanded message tile
            const_spec(w1), const_spec(b1),
            const_spec(w2), const_spec(b2),
            const_spec(w3), const_spec(b3),
        ],
        out_specs=pl.BlockSpec((tile_n, 1), lambda i: (i, 0)),
        compiler_params=pltpu.CompilerParams(
            dimension_semantics=("parallel",)),
        cost_estimate=cost,
    )(img, x_rep, w1, b1, w2, b2, w3, b3)

    dots = dots_col.reshape(n_pad)[:num_graphs].reshape(batch, game_size)
    return jnp.squeeze(dots)   # matches torch .squeeze()


def init_params(key, n_hidden):
    ks = jax.random.split(key, 6)
    scale = 0.02
    w1 = scale * jax.random.normal(ks[0], (1600, 400), jnp.float32)
    b1 = scale * jax.random.normal(ks[1], (1, 400), jnp.float32)
    w2 = scale * jax.random.normal(ks[2], (400, 100), jnp.float32)
    b2 = scale * jax.random.normal(ks[3], (1, 100), jnp.float32)
    w3 = scale * jax.random.normal(ks[4], (100, n_hidden), jnp.float32)
    b3 = scale * jax.random.normal(ks[5], (1, n_hidden), jnp.float32)
    return (w1, b1, w2, b2, w3, b3)


def _reference(x, image, params, game_size):
    w1, b1, w2, b2, w3, b3 = params
    num_graphs = image.shape[0]
    a = image.reshape(num_graphs, 1600).astype(jnp.float32)
    a = jax.nn.leaky_relu(a @ w1 + b1, 0.01)
    a = jax.nn.leaky_relu(a @ w2 + b2, 0.01)
    a = jnp.tanh(a @ w3 + b3)
    b = num_graphs // game_size
    cands = a.reshape(b, game_size, -1)
    dots = jnp.matmul(cands, x[:, :, None])
    return jnp.squeeze(dots)


if __name__ == "__main__":
    game_size = 4
    n_hidden = 32
    batch = 2                        # number of games
    num_graphs = batch * game_size   # candidates / graphs

    key = jax.random.PRNGKey(0)
    k_params, k_x, k_img = jax.random.split(key, 3)
    params = init_params(k_params, n_hidden)
    x = jax.random.normal(k_x, (batch, n_hidden), jnp.float32)              # message
    image = jax.random.normal(k_img, (num_graphs, 1, 40, 40), jnp.float32)  # NCHW

    out = receiver_forward(x, image, params, game_size=game_size)
    out = jax.block_until_ready(out)

    ref = _reference(x, image, params, game_size)
    assert out.shape == (batch, game_size), out.shape
    # bf16 MXU inputs with f32 accumulation vs. an all-f32 reference:
    # bf16-level tolerance.
    assert jnp.allclose(out, ref, rtol=1e-2, atol=1e-2), (out, ref)
    print("KERNEL_OK")
</pallas_src>

<mosaic_0001>
module attributes {stable_mosaic.version = 11 : i64} {
  func.func @receiver_kernel(%arg0: i32, %arg1: memref<8x1600xf32, #tpu.memory_space<vmem>>, %arg2: memref<8x32xf32, #tpu.memory_space<vmem>>, %arg3: memref<1600x400xbf16, #tpu.memory_space<vmem>>, %arg4: memref<1x400xf32, #tpu.memory_space<vmem>>, %arg5: memref<400x128xbf16, #tpu.memory_space<vmem>>, %arg6: memref<1x128xf32, #tpu.memory_space<vmem>>, %arg7: memref<128x32xbf16, #tpu.memory_space<vmem>>, %arg8: memref<1x32xf32, #tpu.memory_space<vmem>>, %arg9: memref<8x1xf32, #tpu.memory_space<vmem>>) attributes {dimension_semantics = [#tpu.dimension_semantics<parallel>], iteration_bounds = array<i64: 1>, scalar_prefetch = 0 : i64, scratch_operands = 0 : i64, tpu.core_type = #tpu.core_type<tc>, window_params = [{transform_indices = @transform_0, window_bounds = array<i64: 8, 1600>}, {transform_indices = @transform_1, window_bounds = array<i64: 8, 32>}, {pipeline_mode = #tpu.pipeline_mode<synchronous>, transform_indices = @transform_2, window_bounds = array<i64: 1600, 400>}, {pipeline_mode = #tpu.pipeline_mode<synchronous>, transform_indices = @transform_3, window_bounds = array<i64: 1, 400>}, {pipeline_mode = #tpu.pipeline_mode<synchronous>, transform_indices = @transform_4, window_bounds = array<i64: 400, 128>}, {pipeline_mode = #tpu.pipeline_mode<synchronous>, transform_indices = @transform_5, window_bounds = array<i64: 1, 128>}, {pipeline_mode = #tpu.pipeline_mode<synchronous>, transform_indices = @transform_6, window_bounds = array<i64: 128, 32>}, {pipeline_mode = #tpu.pipeline_mode<synchronous>, transform_indices = @transform_7, window_bounds = array<i64: 1, 32>}, {transform_indices = @transform_8, window_bounds = array<i64: 8, 1>}]} {
    %c0 = arith.constant 0 : index
    %c0_0 = arith.constant 0 : index
    %0 = vector.load %arg1[%c0, %c0_0] : memref<8x1600xf32, #tpu.memory_space<vmem>>, vector<8x1600xf32>
    %1 = arith.truncf %0 : vector<8x1600xf32> to vector<8x1600xbf16>
    %c0_1 = arith.constant 0 : index
    %c0_2 = arith.constant 0 : index
    %2 = vector.load %arg3[%c0_1, %c0_2] : memref<1600x400xbf16, #tpu.memory_space<vmem>>, vector<1600x400xbf16>
    %cst = arith.constant dense<0.000000e+00> : vector<8x400xf32>
    %3 = tpu.matmul %1, %2, %cst {dimension_numbers = #tpu.dot_dimension_numbers<[1], [0], [0], [1], [0, 0, 1, 1], [], []>} : vector<8x1600xbf16>, vector<1600x400xbf16>, vector<8x400xf32> -> vector<8x400xf32>
    %c0_3 = arith.constant 0 : index
    %c0_4 = arith.constant 0 : index
    %4 = vector.load %arg4[%c0_3, %c0_4] : memref<1x400xf32, #tpu.memory_space<vmem>>, vector<1x400xf32>
    %5 = vector.broadcast %4 : vector<1x400xf32> to vector<8x400xf32>
    %6 = arith.addf %3, %5 : vector<8x400xf32>
    %cst_5 = arith.constant 0.000000e+00 : f32
    %7 = vector.broadcast %cst_5 : f32 to vector<8x400xf32>
    %8 = arith.cmpf oge, %6, %7 : vector<8x400xf32>
    %cst_6 = arith.constant 0.00999999977 : f32
    %9 = vector.broadcast %cst_6 : f32 to vector<8x400xf32>
    %10 = arith.mulf %9, %6 : vector<8x400xf32>
    %11 = arith.select %8, %6, %10 : vector<8x400xi1>, vector<8x400xf32>
    %12 = arith.truncf %11 : vector<8x400xf32> to vector<8x400xbf16>
    %c0_7 = arith.constant 0 : index
    %c0_8 = arith.constant 0 : index
    %13 = vector.load %arg5[%c0_7, %c0_8] : memref<400x128xbf16, #tpu.memory_space<vmem>>, vector<400x128xbf16>
    %cst_9 = arith.constant dense<0.000000e+00> : vector<8x128xf32>
    %14 = tpu.matmul %12, %13, %cst_9 {dimension_numbers = #tpu.dot_dimension_numbers<[1], [0], [0], [1], [0, 0, 1, 1], [], []>} : vector<8x400xbf16>, vector<400x128xbf16>, vector<8x128xf32> -> vector<8x128xf32>
    %c0_10 = arith.constant 0 : index
    %c0_11 = arith.constant 0 : index
    %15 = vector.load %arg6[%c0_10, %c0_11] : memref<1x128xf32, #tpu.memory_space<vmem>>, vector<1x128xf32>
    %16 = vector.broadcast %15 : vector<1x128xf32> to vector<8x128xf32>
    %17 = arith.addf %14, %16 : vector<8x128xf32>
    %cst_12 = arith.constant 0.000000e+00 : f32
    %18 = vector.broadcast %cst_12 : f32 to vector<8x128xf32>
    %19 = arith.cmpf oge, %17, %18 : vector<8x128xf32>
    %cst_13 = arith.constant 0.00999999977 : f32
    %20 = vector.broadcast %cst_13 : f32 to vector<8x128xf32>
    %21 = arith.mulf %20, %17 : vector<8x128xf32>
    %22 = arith.select %19, %17, %21 : vector<8x128xi1>, vector<8x128xf32>
    %23 = arith.truncf %22 : vector<8x128xf32> to vector<8x128xbf16>
    %c0_14 = arith.constant 0 : index
    %c0_15 = arith.constant 0 : index
    %24 = vector.load %arg7[%c0_14, %c0_15] : memref<128x32xbf16, #tpu.memory_space<vmem>>, vector<128x32xbf16>
    %cst_16 = arith.constant dense<0.000000e+00> : vector<8x32xf32>
    %25 = tpu.matmul %23, %24, %cst_16 {dimension_numbers = #tpu.dot_dimension_numbers<[1], [0], [0], [1], [0, 0, 1, 1], [], []>} : vector<8x128xbf16>, vector<128x32xbf16>, vector<8x32xf32> -> vector<8x32xf32>
    %c0_17 = arith.constant 0 : index
    %c0_18 = arith.constant 0 : index
    %26 = vector.load %arg8[%c0_17, %c0_18] : memref<1x32xf32, #tpu.memory_space<vmem>>, vector<1x32xf32>
    %27 = vector.broadcast %26 : vector<1x32xf32> to vector<8x32xf32>
    %28 = arith.addf %25, %27 : vector<8x32xf32>
    %29 = math.tanh %28 : vector<8x32xf32>
    %c0_19 = arith.constant 0 : index
    %c0_20 = arith.constant 0 : index
    %30 = vector.load %arg2[%c0_19, %c0_20] : memref<8x32xf32, #tpu.memory_space<vmem>>, vector<8x32xf32>
    %31 = arith.mulf %29, %30 : vector<8x32xf32>
    %cst_21 = arith.constant dense<0.000000e+00> : vector<8xf32>
    %32 = vector.multi_reduction <add>, %31, %cst_21 [1] : vector<8x32xf32> to vector<8xf32>
    %33 = vector.shape_cast %32 : vector<8xf32> to vector<8x1xf32>
    %c0_22 = arith.constant 0 : index
    %c0_23 = arith.constant 0 : index
    %34 = vector.load %arg9[%c0_22, %c0_23] : memref<8x1xf32, #tpu.memory_space<vmem>>, vector<8x1xf32>
    tpu.vector_store %arg9[%c0_22, %c0_23], %33 {strides = array<i32>} : memref<8x1xf32, #tpu.memory_space<vmem>>, vector<8x1xf32>,
    return
  }
  func.func @transform_0(%arg0: i32) -> (i32, i32) {
    %c0_i32 = arith.constant 0 : i32
    %c0_i32_0 = arith.constant 0 : i32
    return %arg0, %c0_i32 : i32, i32
  }
  func.func @transform_1(%arg0: i32) -> (i32, i32) {
    %c0_i32 = arith.constant 0 : i32
    %c0_i32_0 = arith.constant 0 : i32
    return %arg0, %c0_i32 : i32, i32
  }
  func.func @transform_2(%arg0: i32) -> (i32, i32) {
    %c0_i32 = arith.constant 0 : i32
    %c0_i32_0 = arith.constant 0 : i32
    %c0_i32_1 = arith.constant 0 : i32
    return %c0_i32, %c0_i32_0 : i32, i32
  }
  func.func @transform_3(%arg0: i32) -> (i32, i32) {
    %c0_i32 = arith.constant 0 : i32
    %c0_i32_0 = arith.constant 0 : i32
    %c0_i32_1 = arith.constant 0 : i32
    return %c0_i32, %c0_i32_0 : i32, i32
  }
  func.func @transform_4(%arg0: i32) -> (i32, i32) {
    %c0_i32 = arith.constant 0 : i32
    %c0_i32_0 = arith.constant 0 : i32
    %c0_i32_1 = arith.constant 0 : i32
    return %c0_i32, %c0_i32_0 : i32, i32
  }
  func.func @transform_5(%arg0: i32) -> (i32, i32) {
    %c0_i32 = arith.constant 0 : i32
    %c0_i32_0 = arith.constant 0 : i32
    %c0_i32_1 = arith.constant 0 : i32
    return %c0_i32, %c0_i32_0 : i32, i32
  }
  func.func @transform_6(%arg0: i32) -> (i32, i32) {
    %c0_i32 = arith.constant 0 : i32
    %c0_i32_0 = arith.constant 0 : i32
    %c0_i32_1 = arith.constant 0 : i32
    return %c0_i32, %c0_i32_0 : i32, i32
  }
  func.func @transform_7(%arg0: i32) -> (i32, i32) {
    %c0_i32 = arith.constant 0 : i32
    %c0_i32_0 = arith.constant 0 : i32
    %c0_i32_1 = arith.constant 0 : i32
    return %c0_i32, %c0_i32_0 : i32, i32
  }
  func.func @transform_8(%arg0: i32) -> (i32, i32) {
    %c0_i32 = arith.constant 0 : i32
    %c0_i32_0 = arith.constant 0 : i32
    return %arg0, %c0_i32 : i32, i32
  }
}

</mosaic_0001>

<llo_original>
// kernel: receiver_forward.1
$region0: #{receiver_forward.1}
  #allocation0 [shape = 'u32[]', space=smem, size = 0x4, offset = 0x4, fixed_abs, tag = 'smem constant byte address 0x4 - core index']
  #allocation1 [shape = 'u32[72,128]{1,0:T(1,128)}', space=vmem, size = 0x9000, scoped, tag = 'internal scratch']
  %s0 = inlined_call_operand.vmem [shape: f32[8,1600], index: 0, kind: input, shape index: {}]
  %s1 = inlined_call_operand.vmem [shape: f32[8,32], index: 1, kind: input, shape index: {}]
  %s2 = inlined_call_operand.vmem [shape: bf16[1600,400], index: 2, kind: input, shape index: {}]
  %s3 = inlined_call_operand.vmem [shape: f32[1,400], index: 3, kind: input, shape index: {}]
  %s4 = inlined_call_operand.vmem [shape: bf16[400,128], index: 4, kind: input, shape index: {}]
  %s5 = inlined_call_operand.vmem [shape: f32[1,128], index: 5, kind: input, shape index: {}]
  %s6 = inlined_call_operand.vmem [shape: bf16[128,32], index: 6, kind: input, shape index: {}]
  %s7 = inlined_call_operand.vmem [shape: f32[1,32], index: 7, kind: input, shape index: {}]
  %s8 = inlined_call_operand.vmem [shape: f32[8,1], index: 8, kind: output, shape index: {}]
  %s9 = sld [smem:[#allocation0]]
  $region42: #{receiver_forward.1} parent=0
    _
  %s11 = ssub.s32 1, %s9
  %s12 = scalar_select 0, %s11, %s9
  // Predicated region
  $region2: #{receiver_forward.1} parent=0 // pred_check
    _
  $region3: #{receiver_forward.1} parent=0 // pred_check_branch
    %14 = sbr.rel (0) target = $region5
  $region4: #{receiver_forward.1} parent=0 // pred_region
    _
  $region5: #{receiver_forward.1} parent=0 // pred_fallthru
    _
  // Predicated region
  $region6: #{receiver_forward.1} parent=0 // pred_check
    _
  $region7: #{receiver_forward.1} parent=0 // pred_check_branch
    %16 = sbr.rel (0) target = $region9
  $region8: #{receiver_forward.1} parent=0 // pred_region
    _
  $region9: #{receiver_forward.1} parent=0 // pred_fallthru
    _
  // Predicated region
  $region10: #{receiver_forward.1} parent=0 // pred_check
    _
  $region11: #{receiver_forward.1} parent=0 // pred_check_branch
    %18 = sbr.rel (0) target = $region13
  $region12: #{receiver_forward.1} parent=0 // pred_region
    _
  $region13: #{receiver_forward.1} parent=0 // pred_fallthru
    _
  // Predicated region
  $region14: #{receiver_forward.1} parent=0 // pred_check
    _
  $region15: #{receiver_forward.1} parent=0 // pred_check_branch
    %20 = sbr.rel (0) target = $region17
  $region16: #{receiver_forward.1} parent=0 // pred_region
    _
  $region17: #{receiver_forward.1} parent=0 // pred_fallthru
    _
  // Predicated region
  $region18: #{receiver_forward.1} parent=0 // pred_check
    _
  $region19: #{receiver_forward.1} parent=0 // pred_check_branch
    %22 = sbr.rel (0) target = $region21
  $region20: #{receiver_forward.1} parent=0 // pred_region
    _
  $region21: #{receiver_forward.1} parent=0 // pred_fallthru
    _
  // Predicated region
  $region22: #{receiver_forward.1} parent=0 // pred_check
    _
  $region23: #{receiver_forward.1} parent=0 // pred_check_branch
    %24 = sbr.rel (0) target = $region25
  $region24: #{receiver_forward.1} parent=0 // pred_region
    _
  $region25: #{receiver_forward.1} parent=0 // pred_fallthru
    _
  // Predicated region
  $region26: #{receiver_forward.1} parent=0 // pred_check
    _
  $region27: #{receiver_forward.1} parent=0 // pred_check_branch
    %26 = sbr.rel (0) target = $region29
  $region28: #{receiver_forward.1} parent=0 // pred_region
    _
  $region29: #{receiver_forward.1} parent=0 // pred_fallthru
    _
  // Predicated region
  $region30: #{receiver_forward.1} parent=0 // pred_check
    _
  $region31: #{receiver_forward.1} parent=0 // pred_check_branch
    %28 = sbr.rel (0) target = $region33
  $region32: #{receiver_forward.1} parent=0 // pred_region
    _
  $region33: #{receiver_forward.1} parent=0 // pred_fallthru
    _
  %v30 = vld [vmem:[%s0] sm:$0xff]
  %v31 = vld [vmem:[%s0 + $0x8] sm:$0xff]
  %v32 = vld [vmem:[%s0 + $0x10] sm:$0xff]
  %v33 = vld [vmem:[%s0 + $0x18] sm:$0xff]
  %v34 = vld [vmem:[%s0 + $0x20] sm:$0xff]
  %v35 = vld [vmem:[%s0 + $0x28] sm:$0xff]
  %v36 = vld [vmem:[%s0 + $0x30] sm:$0xff]
  %v37 = vld [vmem:[%s0 + $0x38] sm:$0xff]
  %v38 = vld [vmem:[%s0 + $0x40] sm:$0xff]
  %v39 = vld [vmem:[%s0 + $0x48] sm:$0xff]
  %v40 = vld [vmem:[%s0 + $0x50] sm:$0xff]
  %v41 = vld [vmem:[%s0 + $0x58] sm:$0xff]
  %v42 = vld [vmem:[%s0 + $0x60] sm:$0xff]
  %v43 = vpack.c.bf16 %v30, %v30
  %v44 = vpack.c.bf16 %v31, %v31
  %v45 = vpack.c.bf16 %v32, %v32
  %v46 = vpack.c.bf16 %v33, %v33
  %v47 = vpack.c.bf16 %v34, %v34
  %v48 = vpack.c.bf16 %v35, %v35
  %v49 = vpack.c.bf16 %v36, %v36
  %v50 = vpack.c.bf16 %v37, %v37
  %v51 = vpack.c.bf16 %v38, %v38
  %v52 = vpack.c.bf16 %v39, %v39
  %v53 = vpack.c.bf16 %v40, %v40
  %v54 = vpack.c.bf16 %v41, %v41
  %v55 = vpack.c.bf16 %v42, %v42
  %v56 = vld [vmem:[%s2] sm:$0xff]
  %v57 = vld [vmem:[%s2 + $0x8] sm:$0xff]
  %v58 = vld [vmem:[%s2 + $0x10] sm:$0xff]
  %v59 = vld [vmem:[%s2 + $0x18] sm:$0xff]
  %v60 = vld [vmem:[%s2 + $0x20] sm:$0xff]
  %v61 = vld [vmem:[%s2 + $0x28] sm:$0xff]
  %v62 = vld [vmem:[%s2 + $0x30] sm:$0xff]
  %v63 = vld [vmem:[%s2 + $0x38] sm:$0xff]
  %v64 = vld [vmem:[%s2 + $0x40] sm:$0xff]
  %v65 = vld [vmem:[%s2 + $0x48] sm:$0xff]
  %v66 = vld [vmem:[%s2 + $0x50] sm:$0xff]
  %v67 = vld [vmem:[%s2 + $0x58] sm:$0xff]
  %v68 = vld [vmem:[%s2 + $0x60] sm:$0xff]
  %v69 = vld [vmem:[%s2 + $0x68] sm:$0xff]
  %v70 = vld [vmem:[%s2 + $0x70] sm:$0xff]
  %v71 = vld [vmem:[%s2 + $0x78] sm:$0xff]
  %v72 = vld [vmem:[%s2 + $0x80] sm:$0xff]
  %v73 = vld [vmem:[%s2 + $0x88] sm:$0xff]
  %v74 = vld [vmem:[%s2 + $0x90] sm:$0xff]
  %v75 = vld [vmem:[%s2 + $0x98] sm:$0xff]
  %v76 = vld [vmem:[%s2 + $0xa0] sm:$0xff]
  %v77 = vld [vmem:[%s2 + $0xa8] sm:$0xff]
  %v78 = vld [vmem:[%s2 + $0xb0] sm:$0xff]
  %v79 = vld [vmem:[%s2 + $0xb8] sm:$0xff]
  %v80 = vld [vmem:[%s2 + $0xc0] sm:$0xff]
  %v81 = vld [vmem:[%s2 + $0xc8] sm:$0xff]
  %v82 = vld [vmem:[%s2 + $0xd0] sm:$0xff]
  %v83 = vld [vmem:[%s2 + $0xd8] sm:$0xff]
  %v84 = vld [vmem:[%s2 + $0xe0] sm:$0xff]
  %v85 = vld [vmem:[%s2 + $0xe8] sm:$0xff]
  %v86 = vld [vmem:[%s2 + $0xf0] sm:$0xff]
  %v87 = vld [vmem:[%s2 + $0xf8] sm:$0xff]
  %v88 = vld [vmem:[%s2 + $0x100] sm:$0xff]
  %v89 = vld [vmem:[%s2 + $0x108] sm:$0xff]
  %v90 = vld [vmem:[%s2 + $0x110] sm:$0xff]
  %v91 = vld [vmem:[%s2 + $0x118] sm:$0xff]
  %v92 = vld [vmem:[%s2 + $0x120] sm:$0xff]
  %v93 = vld [vmem:[%s2 + $0x128] sm:$0xff]
  %v94 = vld [vmem:[%s2 + $0x130] sm:$0xff]
  %v95 = vld [vmem:[%s2 + $0x138] sm:$0xff]
  %v96 = vld [vmem:[%s2 + $0x140] sm:$0xff]
  %v97 = vld [vmem:[%s2 + $0x148] sm:$0xff]
  %v98 = vld [vmem:[%s2 + $0x150] sm:$0xff]
  %v99 = vld [vmem:[%s2 + $0x158] sm:$0xff]
  %v100 = vld [vmem:[%s2 + $0x160] sm:$0xff]
  %v101 = vld [vmem:[%s2 + $0x168] sm:$0xff]
  %v102 = vld [vmem:[%s2 + $0x170] sm:$0xff]
  %v103 = vld [vmem:[%s2 + $0x178] sm:$0xff]
  %v104 = vld [vmem:[%s2 + $0x180] sm:$0xff]
  %v105 = vld [vmem:[%s2 + $0x188] sm:$0xff]
  %v106 = vld [vmem:[%s2 + $0x190] sm:$0xff]
  %v107 = vld [vmem:[%s2 + $0x198] sm:$0xff]
  %v108 = vld [vmem:[%s2 + $0x1a0] sm:$0xff]
  %v109 = vld [vmem:[%s2 + $0x1a8] sm:$0xff]
  %v110 = vld [vmem:[%s2 + $0x1b0] sm:$0xff]
  %v111 = vld [vmem:[%s2 + $0x1b8] sm:$0xff]
  %v112 = vld [vmem:[%s2 + $0x1c0] sm:$0xff]
  %v113 = vld [vmem:[%s2 + $0x1c8] sm:$0xff]
  %v114 = vld [vmem:[%s2 + $0x1d0] sm:$0xff]
  %v115 = vld [vmem:[%s2 + $0x1d8] sm:$0xff]
  %v116 = vld [vmem:[%s2 + $0x1e0] sm:$0xff]
  %v117 = vld [vmem:[%s2 + $0x1e8] sm:$0xff]
  %v118 = vld [vmem:[%s2 + $0x1f0] sm:$0xff]
  %v119 = vld [vmem:[%s2 + $0x1f8] sm:$0xff]
  %v120 = vld [vmem:[%s2 + $0x200] sm:$0xff]
  %v121 = vld [vmem:[%s2 + $0x208] sm:$0xff]
  %v122 = vld [vmem:[%s2 + $0x210] sm:$0xff]
  %v123 = vld [vmem:[%s2 + $0x218] sm:$0xff]
  %v124 = vld [vmem:[%s2 + $0x220] sm:$0xff]
  %v125 = vld [vmem:[%s2 + $0x228] sm:$0xff]
  %v126 = vld [vmem:[%s2 + $0x230] sm:$0xff]
  %v127 = vld [vmem:[%s2 + $0x238] sm:$0xff]
  %v128 = vld [vmem:[%s2 + $0x240] sm:$0xff]
  %v129 = vld [vmem:[%s2 + $0x248] sm:$0xff]
  %v130 = vld [vmem:[%s2 + $0x250] sm:$0xff]
  %v131 = vld [vmem:[%s2 + $0x258] sm:$0xff]
  %v132 = vld [vmem:[%s2 + $0x260] sm:$0xff]
  %v133 = vld [vmem:[%s2 + $0x268] sm:$0xff]
  %v134 = vld [vmem:[%s2 + $0x270] sm:$0xff]
  %v135 = vld [vmem:[%s2 + $0x278] sm:$0xff]
  %v136 = vld [vmem:[%s2 + $0x280] sm:$0xff]
  %v137 = vld [vmem:[%s2 + $0x288] sm:$0xff]
  %v138 = vld [vmem:[%s2 + $0x290] sm:$0xff]
  %v139 = vld [vmem:[%s2 + $0x298] sm:$0xff]
  %v140 = vld [vmem:[%s2 + $0x2a0] sm:$0xff]
  %v141 = vld [vmem:[%s2 + $0x2a8] sm:$0xff]
  %v142 = vld [vmem:[%s2 + $0x2b0] sm:$0xff]
  %v143 = vld [vmem:[%s2 + $0x2b8] sm:$0xff]
  %v144 = vld [vmem:[%s2 + $0x2c0] sm:$0xff]
  %v145 = vld [vmem:[%s2 + $0x2c8] sm:$0xff]
  %v146 = vld [vmem:[%s2 + $0x2d0] sm:$0xff]
  %v147 = vld [vmem:[%s2 + $0x2d8] sm:$0xff]
  %v148 = vld [vmem:[%s2 + $0x2e0] sm:$0xff]
  %v149 = vld [vmem:[%s2 + $0x2e8] sm:$0xff]
  %v150 = vld [vmem:[%s2 + $0x2f0] sm:$0xff]
  %v151 = vld [vmem:[%s2 + $0x2f8] sm:$0xff]
  %v152 = vld [vmem:[%s2 + $0x300] sm:$0xff]
  %v153 = vld [vmem:[%s2 + $0x308] sm:$0xff]
  %v154 = vld [vmem:[%s2 + $0x310] sm:$0xff]
  %v155 = vld [vmem:[%s2 + $0x318] sm:$0xff]
  %v156 = vld [vmem:[%s2 + $0x320] sm:$0xff]
  %v157 = vld [vmem:[%s2 + $0x328] sm:$0xff]
  %v158 = vld [vmem:[%s2 + $0x330] sm:$0xff]
  %v159 = vld [vmem:[%s2 + $0x338] sm:$0xff]
  %v160 = vld [vmem:[%s2 + $0x340] sm:$0xff]
  %v161 = vld [vmem:[%s2 + $0x348] sm:$0xff]
  %v162 = vld [vmem:[%s2 + $0x350] sm:$0xff]
  %v163 = vld [vmem:[%s2 + $0x358] sm:$0xff]
  %v164 = vld [vmem:[%s2 + $0x360] sm:$0xff]
  %v165 = vld [vmem:[%s2 + $0x368] sm:$0xff]
  %v166 = vld [vmem:[%s2 + $0x370] sm:$0xff]
  %v167 = vld [vmem:[%s2 + $0x378] sm:$0xff]
  %v168 = vld [vmem:[%s2 + $0x380] sm:$0xff]
  %v169 = vld [vmem:[%s2 + $0x388] sm:$0xff]
  %v170 = vld [vmem:[%s2 + $0x390] sm:$0xff]
  %v171 = vld [vmem:[%s2 + $0x398] sm:$0xff]
  %v172 = vld [vmem:[%s2 + $0x3a0] sm:$0xff]
  %v173 = vld [vmem:[%s2 + $0x3a8] sm:$0xff]
  %v174 = vld [vmem:[%s2 + $0x3b0] sm:$0xff]
  %v175 = vld [vmem:[%s2 + $0x3b8] sm:$0xff]
  %v176 = vld [vmem:[%s2 + $0x3c0] sm:$0xff]
  %v177 = vld [vmem:[%s2 + $0x3c8] sm:$0xff]
  %v178 = vld [vmem:[%s2 + $0x3d0] sm:$0xff]
  %v179 = vld [vmem:[%s2 + $0x3d8] sm:$0xff]
  %v180 = vld [vmem:[%s2 + $0x3e0] sm:$0xff]
  %v181 = vld [vmem:[%s2 + $0x3e8] sm:$0xff]
  %v182 = vld [vmem:[%s2 + $0x3f0] sm:$0xff]
  %v183 = vld [vmem:[%s2 + $0x3f8] sm:$0xff]
  %v184 = vld [vmem:[%s2 + $0x400] sm:$0xff]
  %v185 = vld [vmem:[%s2 + $0x408] sm:$0xff]
  %v186 = vld [vmem:[%s2 + $0x410] sm:$0xff]
  %v187 = vld [vmem:[%s2 + $0x418] sm:$0xff]
  %v188 = vld [vmem:[%s2 + $0x420] sm:$0xff]
  %v189 = vld [vmem:[%s2 + $0x428] sm:$0xff]
  %v190 = vld [vmem:[%s2 + $0x430] sm:$0xff]
  %v191 = vld [vmem:[%s2 + $0x438] sm:$0xff]
  %v192 = vld [vmem:[%s2 + $0x440] sm:$0xff]
  %v193 = vld [vmem:[%s2 + $0x448] sm:$0xff]
  %v194 = vld [vmem:[%s2 + $0x450] sm:$0xff]
  %v195 = vld [vmem:[%s2 + $0x458] sm:$0xff]
  %v196 = vld [vmem:[%s2 + $0x460] sm:$0xff]
  %v197 = vld [vmem:[%s2 + $0x468] sm:$0xff]
  %v198 = vld [vmem:[%s2 + $0x470] sm:$0xff]
  %v199 = vld [vmem:[%s2 + $0x478] sm:$0xff]
  %v200 = vld [vmem:[%s2 + $0x480] sm:$0xff]
  %v201 = vld [vmem:[%s2 + $0x488] sm:$0xff]
  %v202 = vld [vmem:[%s2 + $0x490] sm:$0xff]
  %v203 = vld [vmem:[%s2 + $0x498] sm:$0xff]
  %v204 = vld [vmem:[%s2 + $0x4a0] sm:$0xff]
  %v205 = vld [vmem:[%s2 + $0x4a8] sm:$0xff]
  %v206 = vld [vmem:[%s2 + $0x4b0] sm:$0xff]
  %v207 = vld [vmem:[%s2 + $0x4b8] sm:$0xff]
  %v208 = vld [vmem:[%s2 + $0x4c0] sm:$0xff]
  %v209 = vld [vmem:[%s2 + $0x4c8] sm:$0xff]
  %v210 = vld [vmem:[%s2 + $0x4d0] sm:$0xff]
  %v211 = vld [vmem:[%s2 + $0x4d8] sm:$0xff]
  %v212 = vld [vmem:[%s2 + $0x4e0] sm:$0xff]
  %v213 = vld [vmem:[%s2 + $0x4e8] sm:$0xff]
  %v214 = vld [vmem:[%s2 + $0x4f0] sm:$0xff]
  %v215 = vld [vmem:[%s2 + $0x4f8] sm:$0xff]
  %v216 = vld [vmem:[%s2 + $0x500] sm:$0xff]
  %v217 = vld [vmem:[%s2 + $0x508] sm:$0xff]
  %v218 = vld [vmem:[%s2 + $0x510] sm:$0xff]
  %v219 = vld [vmem:[%s2 + $0x518] sm:$0xff]
  %v220 = vld [vmem:[%s2 + $0x520] sm:$0xff]
  %v221 = vld [vmem:[%s2 + $0x528] sm:$0xff]
  %v222 = vld [vmem:[%s2 + $0x530] sm:$0xff]
  %v223 = vld [vmem:[%s2 + $0x538] sm:$0xff]
  %v224 = vld [vmem:[%s2 + $0x540] sm:$0xff]
  %v225 = vld [vmem:[%s2 + $0x548] sm:$0xff]
  %v226 = vld [vmem:[%s2 + $0x550] sm:$0xff]
  %v227 = vld [vmem:[%s2 + $0x558] sm:$0xff]
  %v228 = vld [vmem:[%s2 + $0x560] sm:$0xff]
  %v229 = vld [vmem:[%s2 + $0x568] sm:$0xff]
  %v230 = vld [vmem:[%s2 + $0x570] sm:$0xff]
  %v231 = vld [vmem:[%s2 + $0x578] sm:$0xff]
  %v232 = vld [vmem:[%s2 + $0x580] sm:$0xff]
  %v233 = vld [vmem:[%s2 + $0x588] sm:$0xff]
  %v234 = vld [vmem:[%s2 + $0x590] sm:$0xff]
  %v235 = vld [vmem:[%s2 + $0x598] sm:$0xff]
  %v236 = vld [vmem:[%s2 + $0x5a0] sm:$0xff]
  %v237 = vld [vmem:[%s2 + $0x5a8] sm:$0xff]
  %v238 = vld [vmem:[%s2 + $0x5b0] sm:$0xff]
  %v239 = vld [vmem:[%s2 + $0x5b8] sm:$0xff]
  %v240 = vld [vmem:[%s2 + $0x5c0] sm:$0xff]
  %v241 = vld [vmem:[%s2 + $0x5c8] sm:$0xff]
  %v242 = vld [vmem:[%s2 + $0x5d0] sm:$0xff]
  %v243 = vld [vmem:[%s2 + $0x5d8] sm:$0xff]
  %v244 = vld [vmem:[%s2 + $0x5e0] sm:$0xff]
  %v245 = vld [vmem:[%s2 + $0x5e8] sm:$0xff]
  %v246 = vld [vmem:[%s2 + $0x5f0] sm:$0xff]
  %v247 = vld [vmem:[%s2 + $0x5f8] sm:$0xff]
  %v248 = vld [vmem:[%s2 + $0x600] sm:$0xff]
  %v249 = vld [vmem:[%s2 + $0x608] sm:$0xff]
  %v250 = vld [vmem:[%s2 + $0x610] sm:$0xff]
  %v251 = vld [vmem:[%s2 + $0x618] sm:$0xff]
  %v252 = vld [vmem:[%s2 + $0x620] sm:$0xff]
  %v253 = vld [vmem:[%s2 + $0x628] sm:$0xff]
  %v254 = vld [vmem:[%s2 + $0x630] sm:$0xff]
  %v255 = vld [vmem:[%s2 + $0x638] sm:$0xff]
  %v256 = vld [vmem:[%s2 + $0x640] sm:$0xff]
  %v257 = vld [vmem:[%s2 + $0x648] sm:$0xff]
  %v258 = vld [vmem:[%s2 + $0x650] sm:$0xff]
  %v259 = vld [vmem:[%s2 + $0x658] sm:$0xff]
  %v260 = vld [vmem:[%s2 + $0x660] sm:$0xff]
  %v261 = vld [vmem:[%s2 + $0x668] sm:$0xff]
  %v262 = vld [vmem:[%s2 + $0x670] sm:$0xff]
  %v263 = vld [vmem:[%s2 + $0x678] sm:$0xff]
  %v264 = vld [vmem:[%s2 + $0x680] sm:$0xff]
  %v265 = vld [vmem:[%s2 + $0x688] sm:$0xff]
  %v266 = vld [vmem:[%s2 + $0x690] sm:$0xff]
  %v267 = vld [vmem:[%s2 + $0x698] sm:$0xff]
  %v268 = vld [vmem:[%s2 + $0x6a0] sm:$0xff]
  %v269 = vld [vmem:[%s2 + $0x6a8] sm:$0xff]
  %v270 = vld [vmem:[%s2 + $0x6b0] sm:$0xff]
  %v271 = vld [vmem:[%s2 + $0x6b8] sm:$0xff]
  %v272 = vld [vmem:[%s2 + $0x6c0] sm:$0xff]
  %v273 = vld [vmem:[%s2 + $0x6c8] sm:$0xff]
  %v274 = vld [vmem:[%s2 + $0x6d0] sm:$0xff]
  %v275 = vld [vmem:[%s2 + $0x6d8] sm:$0xff]
  %v276 = vld [vmem:[%s2 + $0x6e0] sm:$0xff]
  %v277 = vld [vmem:[%s2 + $0x6e8] sm:$0xff]
  %v278 = vld [vmem:[%s2 + $0x6f0] sm:$0xff]
  %v279 = vld [vmem:[%s2 + $0x6f8] sm:$0xff]
  %v280 = vld [vmem:[%s2 + $0x700] sm:$0xff]
  %v281 = vld [vmem:[%s2 + $0x708] sm:$0xff]
  %v282 = vld [vmem:[%s2 + $0x710] sm:$0xff]
  %v283 = vld [vmem:[%s2 + $0x718] sm:$0xff]
  %v284 = vld [vmem:[%s2 + $0x720] sm:$0xff]
  %v285 = vld [vmem:[%s2 + $0x728] sm:$0xff]
  %v286 = vld [vmem:[%s2 + $0x730] sm:$0xff]
  %v287 = vld [vmem:[%s2 + $0x738] sm:$0xff]
  %v288 = vld [vmem:[%s2 + $0x740] sm:$0xff]
  %v289 = vld [vmem:[%s2 + $0x748] sm:$0xff]
  %v290 = vld [vmem:[%s2 + $0x750] sm:$0xff]
  %v291 = vld [vmem:[%s2 + $0x758] sm:$0xff]
  %v292 = vld [vmem:[%s2 + $0x760] sm:$0xff]
  %v293 = vld [vmem:[%s2 + $0x768] sm:$0xff]
  %v294 = vld [vmem:[%s2 + $0x770] sm:$0xff]
  %v295 = vld [vmem:[%s2 + $0x778] sm:$0xff]
  %v296 = vld [vmem:[%s2 + $0x780] sm:$0xff]
  %v297 = vld [vmem:[%s2 + $0x788] sm:$0xff]
  %v298 = vld [vmem:[%s2 + $0x790] sm:$0xff]
  %v299 = vld [vmem:[%s2 + $0x798] sm:$0xff]
  %v300 = vld [vmem:[%s2 + $0x7a0] sm:$0xff]
  %v301 = vld [vmem:[%s2 + $0x7a8] sm:$0xff]
  %v302 = vld [vmem:[%s2 + $0x7b0] sm:$0xff]
  %v303 = vld [vmem:[%s2 + $0x7b8] sm:$0xff]
  %v304 = vld [vmem:[%s2 + $0x7c0] sm:$0xff]
  %v305 = vld [vmem:[%s2 + $0x7c8] sm:$0xff]
  %v306 = vld [vmem:[%s2 + $0x7d0] sm:$0xff]
  %v307 = vld [vmem:[%s2 + $0x7d8] sm:$0xff]
  %v308 = vld [vmem:[%s2 + $0x7e0] sm:$0xff]
  %v309 = vld [vmem:[%s2 + $0x7e8] sm:$0xff]
  %v310 = vld [vmem:[%s2 + $0x7f0] sm:$0xff]
  %v311 = vld [vmem:[%s2 + $0x7f8] sm:$0xff]
  %v312 = vld [vmem:[%s2 + $0x800] sm:$0xff]
  %v313 = vld [vmem:[%s2 + $0x808] sm:$0xff]
  %v314 = vld [vmem:[%s2 + $0x810] sm:$0xff]
  %v315 = vld [vmem:[%s2 + $0x818] sm:$0xff]
  %v316 = vld [vmem:[%s2 + $0x820] sm:$0xff]
  %v317 = vld [vmem:[%s2 + $0x828] sm:$0xff]
  %v318 = vld [vmem:[%s2 + $0x830] sm:$0xff]
  %v319 = vld [vmem:[%s2 + $0x838] sm:$0xff]
  %v320 = vld [vmem:[%s2 + $0x840] sm:$0xff]
  %v321 = vld [vmem:[%s2 + $0x848] sm:$0xff]
  %v322 = vld [vmem:[%s2 + $0x850] sm:$0xff]
  %v323 = vld [vmem:[%s2 + $0x858] sm:$0xff]
  %v324 = vld [vmem:[%s2 + $0x860] sm:$0xff]
  %v325 = vld [vmem:[%s2 + $0x868] sm:$0xff]
  %v326 = vld [vmem:[%s2 + $0x870] sm:$0xff]
  %v327 = vld [vmem:[%s2 + $0x878] sm:$0xff]
  %v328 = vld [vmem:[%s2 + $0x880] sm:$0xff]
  %v329 = vld [vmem:[%s2 + $0x888] sm:$0xff]
  %v330 = vld [vmem:[%s2 + $0x890] sm:$0xff]
  %v331 = vld [vmem:[%s2 + $0x898] sm:$0xff]
  %v332 = vld [vmem:[%s2 + $0x8a0] sm:$0xff]
  %v333 = vld [vmem:[%s2 + $0x8a8] sm:$0xff]
  %v334 = vld [vmem:[%s2 + $0x8b0] sm:$0xff]
  %v335 = vld [vmem:[%s2 + $0x8b8] sm:$0xff]
  %v336 = vld [vmem:[%s2 + $0x8c0] sm:$0xff]
  %v337 = vld [vmem:[%s2 + $0x8c8] sm:$0xff]
  %v338 = vld [vmem:[%s2 + $0x8d0] sm:$0xff]
  %v339 = vld [vmem:[%s2 + $0x8d8] sm:$0xff]
  %v340 = vld [vmem:[%s2 + $0x8e0] sm:$0xff]
  %v341 = vld [vmem:[%s2 + $0x8e8] sm:$0xff]
  %v342 = vld [vmem:[%s2 + $0x8f0] sm:$0xff]
  %v343 = vld [vmem:[%s2 + $0x8f8] sm:$0xff]
  %v344 = vld [vmem:[%s2 + $0x900] sm:$0xff]
  %v345 = vld [vmem:[%s2 + $0x908] sm:$0xff]
  %v346 = vld [vmem:[%s2 + $0x910] sm:$0xff]
  %v347 = vld [vmem:[%s2 + $0x918] sm:$0xff]
  %v348 = vld [vmem:[%s2 + $0x920] sm:$0xff]
  %v349 = vld [vmem:[%s2 + $0x928] sm:$0xff]
  %v350 = vld [vmem:[%s2 + $0x930] sm:$0xff]
  %v351 = vld [vmem:[%s2 + $0x938] sm:$0xff]
  %v352 = vld [vmem:[%s2 + $0x940] sm:$0xff]
  %v353 = vld [vmem:[%s2 + $0x948] sm:$0xff]
  %v354 = vld [vmem:[%s2 + $0x950] sm:$0xff]
  %v355 = vld [vmem:[%s2 + $0x958] sm:$0xff]
  %v356 = vld [vmem:[%s2 + $0x960] sm:$0xff]
  %v357 = vld [vmem:[%s2 + $0x968] sm:$0xff]
  %v358 = vld [vmem:[%s2 + $0x970] sm:$0xff]
  %v359 = vld [vmem:[%s2 + $0x978] sm:$0xff]
  %v360 = vld [vmem:[%s2 + $0x980] sm:$0xff]
  %v361 = vld [vmem:[%s2 + $0x988] sm:$0xff]
  %v362 = vld [vmem:[%s2 + $0x990] sm:$0xff]
  %v363 = vld [vmem:[%s2 + $0x998] sm:$0xff]
  %v364 = vld [vmem:[%s2 + $0x9a0] sm:$0xff]
  %v365 = vld [vmem:[%s2 + $0x9a8] sm:$0xff]
  %v366 = vld [vmem:[%s2 + $0x9b0] sm:$0xff]
  %v367 = vld [vmem:[%s2 + $0x9b8] sm:$0xff]
  %v368 = vld [vmem:[%s2 + $0x9c0] sm:$0xff]
  %v369 = vld [vmem:[%s2 + $0x9c8] sm:$0xff]
  %v370 = vld [vmem:[%s2 + $0x9d0] sm:$0xff]
  %v371 = vld [vmem:[%s2 + $0x9d8] sm:$0xff]
  %v372 = vld [vmem:[%s2 + $0x9e0] sm:$0xff]
  %v373 = vld [vmem:[%s2 + $0x9e8] sm:$0xff]
  %v374 = vld [vmem:[%s2 + $0x9f0] sm:$0xff]
  %v375 = vld [vmem:[%s2 + $0x9f8] sm:$0xff]
  %v376 = vld [vmem:[%s2 + $0xa00] sm:$0xff]
  %v377 = vld [vmem:[%s2 + $0xa08] sm:$0xff]
  %v378 = vld [vmem:[%s2 + $0xa10] sm:$0xff]
  %v379 = vld [vmem:[%s2 + $0xa18] sm:$0xff]
  %v380 = vld [vmem:[%s2 + $0xa20] sm:$0xff]
  %v381 = vld [vmem:[%s2 + $0xa28] sm:$0xff]
  %v382 = vld [vmem:[%s2 + $0xa30] sm:$0xff]
  %v383 = vld [vmem:[%s2 + $0xa38] sm:$0xff]
  %v384 = vld [vmem:[%s2 + $0xa40] sm:$0xff]
  %v385 = vld [vmem:[%s2 + $0xa48] sm:$0xff]
  %v386 = vld [vmem:[%s2 + $0xa50] sm:$0xff]
  %v387 = vld [vmem:[%s2 + $0xa58] sm:$0xff]
  %v388 = vld [vmem:[%s2 + $0xa60] sm:$0xff]
  %v389 = vld [vmem:[%s2 + $0xa68] sm:$0xff]
  %v390 = vld [vmem:[%s2 + $0xa70] sm:$0xff]
  %v391 = vld [vmem:[%s2 + $0xa78] sm:$0xff]
  %v392 = vld [vmem:[%s2 + $0xa80] sm:$0xff]
  %v393 = vld [vmem:[%s2 + $0xa88] sm:$0xff]
  %v394 = vld [vmem:[%s2 + $0xa90] sm:$0xff]
  %v395 = vld [vmem:[%s2 + $0xa98] sm:$0xff]
  %v396 = vld [vmem:[%s2 + $0xaa0] sm:$0xff]
  %v397 = vld [vmem:[%s2 + $0xaa8] sm:$0xff]
  %v398 = vld [vmem:[%s2 + $0xab0] sm:$0xff]
  %v399 = vld [vmem:[%s2 + $0xab8] sm:$0xff]
  %v400 = vld [vmem:[%s2 + $0xac0] sm:$0xff]
  %v401 = vld [vmem:[%s2 + $0xac8] sm:$0xff]
  %v402 = vld [vmem:[%s2 + $0xad0] sm:$0xff]
  %v403 = vld [vmem:[%s2 + $0xad8] sm:$0xff]
  %v404 = vld [vmem:[%s2 + $0xae0] sm:$0xff]
  %v405 = vld [vmem:[%s2 + $0xae8] sm:$0xff]
  %v406 = vld [vmem:[%s2 + $0xaf0] sm:$0xff]
  %v407 = vld [vmem:[%s2 + $0xaf8] sm:$0xff]
  %v408 = vld [vmem:[%s2 + $0xb00] sm:$0xff]
  %v409 = vld [vmem:[%s2 + $0xb08] sm:$0xff]
  %v410 = vld [vmem:[%s2 + $0xb10] sm:$0xff]
  %v411 = vld [vmem:[%s2 + $0xb18] sm:$0xff]
  %v412 = vld [vmem:[%s2 + $0xb20] sm:$0xff]
  %v413 = vld [vmem:[%s2 + $0xb28] sm:$0xff]
  %v414 = vld [vmem:[%s2 + $0xb30] sm:$0xff]
  %v415 = vld [vmem:[%s2 + $0xb38] sm:$0xff]
  %v416 = vld [vmem:[%s2 + $0xb40] sm:$0xff]
  %v417 = vld [vmem:[%s2 + $0xb48] sm:$0xff]
  %v418 = vld [vmem:[%s2 + $0xb50] sm:$0xff]
  %v419 = vld [vmem:[%s2 + $0xb58] sm:$0xff]
  %v420 = vld [vmem:[%s2 + $0xb60] sm:$0xff]
  %v421 = vld [vmem:[%s2 + $0xb68] sm:$0xff]
  %v422 = vld [vmem:[%s2 + $0xb70] sm:$0xff]
  %v423 = vld [vmem:[%s2 + $0xb78] sm:$0xff]
  %v424 = vld [vmem:[%s2 + $0xb80] sm:$0xff]
  %v425 = vld [vmem:[%s2 + $0xb88] sm:$0xff]
  %v426 = vld [vmem:[%s2 + $0xb90] sm:$0xff]
  %v427 = vld [vmem:[%s2 + $0xb98] sm:$0xff]
  %v428 = vld [vmem:[%s2 + $0xba0] sm:$0xff]
  %v429 = vld [vmem:[%s2 + $0xba8] sm:$0xff]
  %v430 = vld [vmem:[%s2 + $0xbb0] sm:$0xff]
  %v431 = vld [vmem:[%s2 + $0xbb8] sm:$0xff]
  %v432 = vld [vmem:[%s2 + $0xbc0] sm:$0xff]
  %v433 = vld [vmem:[%s2 + $0xbc8] sm:$0xff]
  %v434 = vld [vmem:[%s2 + $0xbd0] sm:$0xff]
  %v435 = vld [vmem:[%s2 + $0xbd8] sm:$0xff]
  %v436 = vld [vmem:[%s2 + $0xbe0] sm:$0xff]
  %v437 = vld [vmem:[%s2 + $0xbe8] sm:$0xff]
  %v438 = vld [vmem:[%s2 + $0xbf0] sm:$0xff]
  %v439 = vld [vmem:[%s2 + $0xbf8] sm:$0xff]
  %v440 = vld [vmem:[%s2 + $0xc00] sm:$0xff]
  %v441 = vld [vmem:[%s2 + $0xc08] sm:$0xff]
  %v442 = vld [vmem:[%s2 + $0xc10] sm:$0xff]
  %v443 = vld [vmem:[%s2 + $0xc18] sm:$0xff]
  %v444 = vld [vmem:[%s2 + $0xc20] sm:$0xff]
  %v445 = vld [vmem:[%s2 + $0xc28] sm:$0xff]
  %v446 = vld [vmem:[%s2 + $0xc30] sm:$0xff]
  %v447 = vld [vmem:[%s2 + $0xc38] sm:$0xff]
  %v448 = vld [vmem:[%s2 + $0xc40] sm:$0xff]
  %v449 = vld [vmem:[%s2 + $0xc48] sm:$0xff]
  %v450 = vld [vmem:[%s2 + $0xc50] sm:$0xff]
  %v451 = vld [vmem:[%s2 + $0xc58] sm:$0xff]
  %v452 = vld [vmem:[%s2 + $0xc60] sm:$0xff]
  %v453 = vld [vmem:[%s2 + $0xc68] sm:$0xff]
  %v454 = vld [vmem:[%s2 + $0xc70] sm:$0xff]
  %v455 = vld [vmem:[%s2 + $0xc78] sm:$0xff]
  %v456 = vld [vmem:[%s3] sm:$0xf]
  %v458 = vperm.slane %v456, 0
  %v459 = vperm.slane %v456, 1
  %v460 = vperm.slane %v456, 2
  %v461 = vperm.slane %v456, 3
  %v866 = vunpack.c.l.b16 %v56
  %v867 = vunpack.c.h.b16 %v56
  %v868 = vunpack.c.l.b16 %v57
  %v869 = vunpack.c.h.b16 %v57
  %v870 = vunpack.c.l.b16 %v58
  %v871 = vunpack.c.h.b16 %v58
  %v872 = vunpack.c.l.b16 %v59
  %v873 = vunpack.c.h.b16 %v59
  %v874 = vunpack.c.l.b16 %v60
  %v875 = vunpack.c.h.b16 %v60
  %v876 = vunpack.c.l.b16 %v61
  %v877 = vunpack.c.h.b16 %v61
  %v878 = vunpack.c.l.b16 %v62
  %v879 = vunpack.c.h.b16 %v62
  %v880 = vunpack.c.l.b16 %v63
  %v881 = vunpack.c.h.b16 %v63
  %v882 = vunpack.c.l.b16 %v64
  %v883 = vunpack.c.h.b16 %v64
  %v884 = vunpack.c.l.b16 %v65
  %v885 = vunpack.c.h.b16 %v65
  %v886 = vunpack.c.l.b16 %v66
  %v887 = vunpack.c.h.b16 %v66
  %v888 = vunpack.c.l.b16 %v67
  %v889 = vunpack.c.h.b16 %v67
  %v890 = vunpack.c.l.b16 %v68
  %v891 = vunpack.c.h.b16 %v68
  %v892 = vunpack.c.l.b16 %v69
  %v893 = vunpack.c.h.b16 %v69
  %v894 = vunpack.c.l.b16 %v70
  %v895 = vunpack.c.h.b16 %v70
  %v896 = vunpack.c.l.b16 %v71
  %v897 = vunpack.c.h.b16 %v71
  %v898 = vunpack.c.l.b16 %v72
  %v899 = vunpack.c.h.b16 %v72
  %v900 = vunpack.c.l.b16 %v73
  %v901 = vunpack.c.h.b16 %v73
  %v902 = vunpack.c.l.b16 %v74
  %v903 = vunpack.c.h.b16 %v74
  %v904 = vunpack.c.l.b16 %v75
  %v905 = vunpack.c.h.b16 %v75
  %v906 = vunpack.c.l.b16 %v76
  %v907 = vunpack.c.h.b16 %v76
  %v908 = vunpack.c.l.b16 %v77
  %v909 = vunpack.c.h.b16 %v77
  %v910 = vunpack.c.l.b16 %v78
  %v911 = vunpack.c.h.b16 %v78
  %v912 = vunpack.c.l.b16 %v79
  %v913 = vunpack.c.h.b16 %v79
  %v914 = vunpack.c.l.b16 %v80
  %v915 = vunpack.c.h.b16 %v80
  %v916 = vunpack.c.l.b16 %v81
  %v917 = vunpack.c.h.b16 %v81
  %v918 = vunpack.c.l.b16 %v82
  %v919 = vunpack.c.h.b16 %v82
  %v920 = vunpack.c.l.b16 %v83
  %v921 = vunpack.c.h.b16 %v83
  %v922 = vunpack.c.l.b16 %v84
  %v923 = vunpack.c.h.b16 %v84
  %v924 = vunpack.c.l.b16 %v85
  %v925 = vunpack.c.h.b16 %v85
  %v926 = vunpack.c.l.b16 %v86
  %v927 = vunpack.c.h.b16 %v86
  %v928 = vunpack.c.l.b16 %v87
  %v929 = vunpack.c.h.b16 %v87
  %v930 = vunpack.c.l.b16 %v88
  %v931 = vunpack.c.h.b16 %v88
  %v932 = vunpack.c.l.b16 %v89
  %v933 = vunpack.c.h.b16 %v89
  %v934 = vunpack.c.l.b16 %v90
  %v935 = vunpack.c.h.b16 %v90
  %v936 = vunpack.c.l.b16 %v91
  %v937 = vunpack.c.h.b16 %v91
  %v938 = vunpack.c.l.b16 %v92
  %v939 = vunpack.c.h.b16 %v92
  %v940 = vunpack.c.l.b16 %v93
  %v941 = vunpack.c.h.b16 %v93
  %v942 = vunpack.c.l.b16 %v94
  %v943 = vunpack.c.h.b16 %v94
  %v944 = vunpack.c.l.b16 %v95
  %v945 = vunpack.c.h.b16 %v95
  %v946 = vunpack.c.l.b16 %v96
  %v947 = vunpack.c.h.b16 %v96
  %v948 = vunpack.c.l.b16 %v97
  %v949 = vunpack.c.h.b16 %v97
  %v950 = vunpack.c.l.b16 %v98
  %v951 = vunpack.c.h.b16 %v98
  %v952 = vunpack.c.l.b16 %v99
  %v953 = vunpack.c.h.b16 %v99
  %v954 = vunpack.c.l.b16 %v100
  %v955 = vunpack.c.h.b16 %v100
  %v956 = vunpack.c.l.b16 %v101
  %v957 = vunpack.c.h.b16 %v101
  %v958 = vunpack.c.l.b16 %v102
  %v959 = vunpack.c.h.b16 %v102
  %v960 = vunpack.c.l.b16 %v103
  %v961 = vunpack.c.h.b16 %v103
  %v962 = vunpack.c.l.b16 %v104
  %v963 = vunpack.c.h.b16 %v104
  %v964 = vunpack.c.l.b16 %v105
  %v965 = vunpack.c.h.b16 %v105
  %v966 = vunpack.c.l.b16 %v106
  %v967 = vunpack.c.h.b16 %v106
  %v968 = vunpack.c.l.b16 %v107
  %v969 = vunpack.c.h.b16 %v107
  %v970 = vunpack.c.l.b16 %v108
  %v971 = vunpack.c.h.b16 %v108
  %v972 = vunpack.c.l.b16 %v109
  %v973 = vunpack.c.h.b16 %v109
  %v974 = vunpack.c.l.b16 %v110
  %v975 = vunpack.c.h.b16 %v110
  %v976 = vunpack.c.l.b16 %v111
  %v977 = vunpack.c.h.b16 %v111
  %v978 = vunpack.c.l.b16 %v112
  %v979 = vunpack.c.h.b16 %v112
  %v980 = vunpack.c.l.b16 %v113
  %v981 = vunpack.c.h.b16 %v113
  %v982 = vunpack.c.l.b16 %v114
  %v983 = vunpack.c.h.b16 %v114
  %v984 = vunpack.c.l.b16 %v115
  %v985 = vunpack.c.h.b16 %v115
  %v986 = vunpack.c.l.b16 %v116
  %v987 = vunpack.c.h.b16 %v116
  %v988 = vunpack.c.l.b16 %v117
  %v989 = vunpack.c.h.b16 %v117
  %v990 = vunpack.c.l.b16 %v118
  %v991 = vunpack.c.h.b16 %v118
  %v992 = vunpack.c.l.b16 %v119
  %v993 = vunpack.c.h.b16 %v119
  %v994 = vunpack.c.l.b16 %v120
  %v995 = vunpack.c.h.b16 %v120
  %v996 = vunpack.c.l.b16 %v121
  %v997 = vunpack.c.h.b16 %v121
  %v998 = vunpack.c.l.b16 %v122
  %v999 = vunpack.c.h.b16 %v122
  %v1000 = vunpack.c.l.b16 %v123
  %v1001 = vunpack.c.h.b16 %v123
  %v1002 = vunpack.c.l.b16 %v124
  %v1003 = vunpack.c.h.b16 %v124
  %v1004 = vunpack.c.l.b16 %v125
  %v1005 = vunpack.c.h.b16 %v125
  %v1006 = vunpack.c.l.b16 %v126
  %v1007 = vunpack.c.h.b16 %v126
  %v1008 = vunpack.c.l.b16 %v127
  %v1009 = vunpack.c.h.b16 %v127
  %v1010 = vunpack.c.l.b16 %v128
  %v1011 = vunpack.c.h.b16 %v128
  %v1012 = vunpack.c.l.b16 %v129
  %v1013 = vunpack.c.h.b16 %v129
  %v1014 = vunpack.c.l.b16 %v130
  %v1015 = vunpack.c.h.b16 %v130
  %v1016 = vunpack.c.l.b16 %v131
  %v1017 = vunpack.c.h.b16 %v131
  %v1018 = vunpack.c.l.b16 %v132
  %v1019 = vunpack.c.h.b16 %v132
  %v1020 = vunpack.c.l.b16 %v133
  %v1021 = vunpack.c.h.b16 %v133
  %v1022 = vunpack.c.l.b16 %v134
  %v1023 = vunpack.c.h.b16 %v134
  %v1024 = vunpack.c.l.b16 %v135
  %v1025 = vunpack.c.h.b16 %v135
  %v1026 = vunpack.c.l.b16 %v136
  %v1027 = vunpack.c.h.b16 %v136
  %v1028 = vunpack.c.l.b16 %v137
  %v1029 = vunpack.c.h.b16 %v137
  %v1030 = vunpack.c.l.b16 %v138
  %v1031 = vunpack.c.h.b16 %v138
  %v1032 = vunpack.c.l.b16 %v139
  %v1033 = vunpack.c.h.b16 %v139
  %v1034 = vunpack.c.l.b16 %v140
  %v1035 = vunpack.c.h.b16 %v140
  %v1036 = vunpack.c.l.b16 %v141
  %v1037 = vunpack.c.h.b16 %v141
  %v1038 = vunpack.c.l.b16 %v142
  %v1039 = vunpack.c.h.b16 %v142
  %v1040 = vunpack.c.l.b16 %v143
  %v1041 = vunpack.c.h.b16 %v143
  %v1042 = vunpack.c.l.b16 %v144
  %v1043 = vunpack.c.h.b16 %v144
  %v1044 = vunpack.c.l.b16 %v145
  %v1045 = vunpack.c.h.b16 %v145
  %v1046 = vunpack.c.l.b16 %v146
  %v1047 = vunpack.c.h.b16 %v146
  %v1048 = vunpack.c.l.b16 %v147
  %v1049 = vunpack.c.h.b16 %v147
  %v1050 = vunpack.c.l.b16 %v148
  %v1051 = vunpack.c.h.b16 %v148
  %v1052 = vunpack.c.l.b16 %v149
  %v1053 = vunpack.c.h.b16 %v149
  %v1054 = vunpack.c.l.b16 %v150
  %v1055 = vunpack.c.h.b16 %v150
  %v1056 = vunpack.c.l.b16 %v151
  %v1057 = vunpack.c.h.b16 %v151
  %v1058 = vunpack.c.l.b16 %v152
  %v1059 = vunpack.c.h.b16 %v152
  %v1060 = vunpack.c.l.b16 %v153
  %v1061 = vunpack.c.h.b16 %v153
  %v1062 = vunpack.c.l.b16 %v154
  %v1063 = vunpack.c.h.b16 %v154
  %v1064 = vunpack.c.l.b16 %v155
  %v1065 = vunpack.c.h.b16 %v155
  %v1066 = vunpack.c.l.b16 %v156
  %v1067 = vunpack.c.h.b16 %v156
  %v1068 = vunpack.c.l.b16 %v157
  %v1069 = vunpack.c.h.b16 %v157
  %v1070 = vunpack.c.l.b16 %v158
  %v1071 = vunpack.c.h.b16 %v158
  %v1072 = vunpack.c.l.b16 %v159
  %v1073 = vunpack.c.h.b16 %v159
  %v1074 = vunpack.c.l.b16 %v160
  %v1075 = vunpack.c.h.b16 %v160
  %v1076 = vunpack.c.l.b16 %v161
  %v1077 = vunpack.c.h.b16 %v161
  %v1078 = vunpack.c.l.b16 %v162
  %v1079 = vunpack.c.h.b16 %v162
  %v1080 = vunpack.c.l.b16 %v163
  %v1081 = vunpack.c.h.b16 %v163
  %v1082 = vunpack.c.l.b16 %v164
  %v1083 = vunpack.c.h.b16 %v164
  %v1084 = vunpack.c.l.b16 %v165
  %v1085 = vunpack.c.h.b16 %v165
  %v1086 = vunpack.c.l.b16 %v166
  %v1087 = vunpack.c.h.b16 %v166
  %v1088 = vunpack.c.l.b16 %v167
  %v1089 = vunpack.c.h.b16 %v167
  %v1090 = vunpack.c.l.b16 %v168
  %v1091 = vunpack.c.h.b16 %v168
  %v1092 = vunpack.c.l.b16 %v169
  %v1093 = vunpack.c.h.b16 %v169
  %v1094 = vunpack.c.l.b16 %v170
  %v1095 = vunpack.c.h.b16 %v170
  %v1096 = vunpack.c.l.b16 %v171
  %v1097 = vunpack.c.h.b16 %v171
  %v1098 = vunpack.c.l.b16 %v172
  %v1099 = vunpack.c.h.b16 %v172
  %v1100 = vunpack.c.l.b16 %v173
  %v1101 = vunpack.c.h.b16 %v173
  %v1102 = vunpack.c.l.b16 %v174
  %v1103 = vunpack.c.h.b16 %v174
  %v1104 = vunpack.c.l.b16 %v175
  %v1105 = vunpack.c.h.b16 %v175
  %v1106 = vunpack.c.l.b16 %v176
  %v1107 = vunpack.c.h.b16 %v176
  %v1108 = vunpack.c.l.b16 %v177
  %v1109 = vunpack.c.h.b16 %v177
  %v1110 = vunpack.c.l.b16 %v178
  %v1111 = vunpack.c.h.b16 %v178
  %v1112 = vunpack.c.l.b16 %v179
  %v1113 = vunpack.c.h.b16 %v179
  %v1114 = vunpack.c.l.b16 %v180
  %v1115 = vunpack.c.h.b16 %v180
  %v1116 = vunpack.c.l.b16 %v181
  %v1117 = vunpack.c.h.b16 %v181
  %v1118 = vunpack.c.l.b16 %v182
  %v1119 = vunpack.c.h.b16 %v182
  %v1120 = vunpack.c.l.b16 %v183
  %v1121 = vunpack.c.h.b16 %v183
  %v1122 = vunpack.c.l.b16 %v184
  %v1123 = vunpack.c.h.b16 %v184
  %v1124 = vunpack.c.l.b16 %v185
  %v1125 = vunpack.c.h.b16 %v185
  %v1126 = vunpack.c.l.b16 %v186
  %v1127 = vunpack.c.h.b16 %v186
  %v1128 = vunpack.c.l.b16 %v187
  %v1129 = vunpack.c.h.b16 %v187
  %v1130 = vunpack.c.l.b16 %v188
  %v1131 = vunpack.c.h.b16 %v188
  %v1132 = vunpack.c.l.b16 %v189
  %v1133 = vunpack.c.h.b16 %v189
  %v1134 = vunpack.c.l.b16 %v190
  %v1135 = vunpack.c.h.b16 %v190
  %v1136 = vunpack.c.l.b16 %v191
  %v1137 = vunpack.c.h.b16 %v191
  %v1138 = vunpack.c.l.b16 %v192
  %v1139 = vunpack.c.h.b16 %v192
  %v1140 = vunpack.c.l.b16 %v193
  %v1141 = vunpack.c.h.b16 %v193
  %v1142 = vunpack.c.l.b16 %v194
  %v1143 = vunpack.c.h.b16 %v194
  %v1144 = vunpack.c.l.b16 %v195
  %v1145 = vunpack.c.h.b16 %v195
  %v1146 = vunpack.c.l.b16 %v196
  %v1147 = vunpack.c.h.b16 %v196
  %v1148 = vunpack.c.l.b16 %v197
  %v1149 = vunpack.c.h.b16 %v197
  %v1150 = vunpack.c.l.b16 %v198
  %v1151 = vunpack.c.h.b16 %v198
  %v1152 = vunpack.c.l.b16 %v199
  %v1153 = vunpack.c.h.b16 %v199
  %v1154 = vunpack.c.l.b16 %v200
  %v1155 = vunpack.c.h.b16 %v200
  %v1156 = vunpack.c.l.b16 %v201
  %v1157 = vunpack.c.h.b16 %v201
  %v1158 = vunpack.c.l.b16 %v202
  %v1159 = vunpack.c.h.b16 %v202
  %v1160 = vunpack.c.l.b16 %v203
  %v1161 = vunpack.c.h.b16 %v203
  %v1162 = vunpack.c.l.b16 %v204
  %v1163 = vunpack.c.h.b16 %v204
  %v1164 = vunpack.c.l.b16 %v205
  %v1165 = vunpack.c.h.b16 %v205
  %v1166 = vunpack.c.l.b16 %v206
  %v1167 = vunpack.c.h.b16 %v206
  %v1168 = vunpack.c.l.b16 %v207
  %v1169 = vunpack.c.h.b16 %v207
  %v1170 = vunpack.c.l.b16 %v208
  %v1171 = vunpack.c.h.b16 %v208
  %v1172 = vunpack.c.l.b16 %v209
  %v1173 = vunpack.c.h.b16 %v209
  %v1174 = vunpack.c.l.b16 %v210
  %v1175 = vunpack.c.h.b16 %v210
  %v1176 = vunpack.c.l.b16 %v211
  %v1177 = vunpack.c.h.b16 %v211
  %v1178 = vunpack.c.l.b16 %v212
  %v1179 = vunpack.c.h.b16 %v212
  %v1180 = vunpack.c.l.b16 %v213
  %v1181 = vunpack.c.h.b16 %v213
  %v1182 = vunpack.c.l.b16 %v214
  %v1183 = vunpack.c.h.b16 %v214
  %v1184 = vunpack.c.l.b16 %v215
  %v1185 = vunpack.c.h.b16 %v215
  %v1186 = vunpack.c.l.b16 %v216
  %v1187 = vunpack.c.h.b16 %v216
  %v1188 = vunpack.c.l.b16 %v217
  %v1189 = vunpack.c.h.b16 %v217
  %v1190 = vunpack.c.l.b16 %v218
  %v1191 = vunpack.c.h.b16 %v218
  %v1192 = vunpack.c.l.b16 %v219
  %v1193 = vunpack.c.h.b16 %v219
  %v1194 = vunpack.c.l.b16 %v220
  %v1195 = vunpack.c.h.b16 %v220
  %v1196 = vunpack.c.l.b16 %v221
  %v1197 = vunpack.c.h.b16 %v221
  %v1198 = vunpack.c.l.b16 %v222
  %v1199 = vunpack.c.h.b16 %v222
  %v1200 = vunpack.c.l.b16 %v223
  %v1201 = vunpack.c.h.b16 %v223
  %v1202 = vunpack.c.l.b16 %v224
  %v1203 = vunpack.c.h.b16 %v224
  %v1204 = vunpack.c.l.b16 %v225
  %v1205 = vunpack.c.h.b16 %v225
  %v1206 = vunpack.c.l.b16 %v226
  %v1207 = vunpack.c.h.b16 %v226
  %v1208 = vunpack.c.l.b16 %v227
  %v1209 = vunpack.c.h.b16 %v227
  %v1210 = vunpack.c.l.b16 %v228
  %v1211 = vunpack.c.h.b16 %v228
  %v1212 = vunpack.c.l.b16 %v229
  %v1213 = vunpack.c.h.b16 %v229
  %v1214 = vunpack.c.l.b16 %v230
  %v1215 = vunpack.c.h.b16 %v230
  %v1216 = vunpack.c.l.b16 %v231
  %v1217 = vunpack.c.h.b16 %v231
  %v1218 = vunpack.c.l.b16 %v232
  %v1219 = vunpack.c.h.b16 %v232
  %v1220 = vunpack.c.l.b16 %v233
  %v1221 = vunpack.c.h.b16 %v233
  %v1222 = vunpack.c.l.b16 %v234
  %v1223 = vunpack.c.h.b16 %v234
  %v1224 = vunpack.c.l.b16 %v235
  %v1225 = vunpack.c.h.b16 %v235
  %v1226 = vunpack.c.l.b16 %v236
  %v1227 = vunpack.c.h.b16 %v236
  %v1228 = vunpack.c.l.b16 %v237
  %v1229 = vunpack.c.h.b16 %v237
  %v1230 = vunpack.c.l.b16 %v238
  %v1231 = vunpack.c.h.b16 %v238
  %v1232 = vunpack.c.l.b16 %v239
  %v1233 = vunpack.c.h.b16 %v239
  %v1234 = vunpack.c.l.b16 %v240
  %v1235 = vunpack.c.h.b16 %v240
  %v1236 = vunpack.c.l.b16 %v241
  %v1237 = vunpack.c.h.b16 %v241
  %v1238 = vunpack.c.l.b16 %v242
  %v1239 = vunpack.c.h.b16 %v242
  %v1240 = vunpack.c.l.b16 %v243
  %v1241 = vunpack.c.h.b16 %v243
  %v1242 = vunpack.c.l.b16 %v244
  %v1243 = vunpack.c.h.b16 %v244
  %v1244 = vunpack.c.l.b16 %v245
  %v1245 = vunpack.c.h.b16 %v245
  %v1246 = vunpack.c.l.b16 %v246
  %v1247 = vunpack.c.h.b16 %v246
  %v1248 = vunpack.c.l.b16 %v247
  %v1249 = vunpack.c.h.b16 %v247
  %v1250 = vunpack.c.l.b16 %v248
  %v1251 = vunpack.c.h.b16 %v248
  %v1252 = vunpack.c.l.b16 %v249
  %v1253 = vunpack.c.h.b16 %v249
  %v1254 = vunpack.c.l.b16 %v250
  %v1255 = vunpack.c.h.b16 %v250
  %v1256 = vunpack.c.l.b16 %v251
  %v1257 = vunpack.c.h.b16 %v251
  %v1258 = vunpack.c.l.b16 %v252
  %v1259 = vunpack.c.h.b16 %v252
  %v1260 = vunpack.c.l.b16 %v253
  %v1261 = vunpack.c.h.b16 %v253
  %v1262 = vunpack.c.l.b16 %v254
  %v1263 = vunpack.c.h.b16 %v254
  %v1264 = vunpack.c.l.b16 %v255
  %v1265 = vunpack.c.h.b16 %v255
  %v1266 = vunpack.c.l.b16 %v256
  %v1267 = vunpack.c.h.b16 %v256
  %v1268 = vunpack.c.l.b16 %v257
  %v1269 = vunpack.c.h.b16 %v257
  %v1270 = vunpack.c.l.b16 %v258
  %v1271 = vunpack.c.h.b16 %v258
  %v1272 = vunpack.c.l.b16 %v259
  %v1273 = vunpack.c.h.b16 %v259
  %v1274 = vunpack.c.l.b16 %v260
  %v1275 = vunpack.c.h.b16 %v260
  %v1276 = vunpack.c.l.b16 %v261
  %v1277 = vunpack.c.h.b16 %v261
  %v1278 = vunpack.c.l.b16 %v262
  %v1279 = vunpack.c.h.b16 %v262
  %v1280 = vunpack.c.l.b16 %v263
  %v1281 = vunpack.c.h.b16 %v263
  %v1282 = vunpack.c.l.b16 %v264
  %v1283 = vunpack.c.h.b16 %v264
  %v1284 = vunpack.c.l.b16 %v265
  %v1285 = vunpack.c.h.b16 %v265
  %v1286 = vunpack.c.l.b16 %v266
  %v1287 = vunpack.c.h.b16 %v266
  %v1288 = vunpack.c.l.b16 %v267
  %v1289 = vunpack.c.h.b16 %v267
  %v1290 = vunpack.c.l.b16 %v268
  %v1291 = vunpack.c.h.b16 %v268
  %v1292 = vunpack.c.l.b16 %v269
  %v1293 = vunpack.c.h.b16 %v269
  %v1294 = vunpack.c.l.b16 %v270
  %v1295 = vunpack.c.h.b16 %v270
  %v1296 = vunpack.c.l.b16 %v271
  %v1297 = vunpack.c.h.b16 %v271
  %v1298 = vunpack.c.l.b16 %v272
  %v1299 = vunpack.c.h.b16 %v272
  %v1300 = vunpack.c.l.b16 %v273
  %v1301 = vunpack.c.h.b16 %v273
  %v1302 = vunpack.c.l.b16 %v274
  %v1303 = vunpack.c.h.b16 %v274
  %v1304 = vunpack.c.l.b16 %v275
  %v1305 = vunpack.c.h.b16 %v275
  %v1306 = vunpack.c.l.b16 %v276
  %v1307 = vunpack.c.h.b16 %v276
  %v1308 = vunpack.c.l.b16 %v277
  %v1309 = vunpack.c.h.b16 %v277
  %v1310 = vunpack.c.l.b16 %v278
  %v1311 = vunpack.c.h.b16 %v278
  %v1312 = vunpack.c.l.b16 %v279
  %v1313 = vunpack.c.h.b16 %v279
  %v1314 = vunpack.c.l.b16 %v280
  %v1315 = vunpack.c.h.b16 %v280
  %v1316 = vunpack.c.l.b16 %v281
  %v1317 = vunpack.c.h.b16 %v281
  %v1318 = vunpack.c.l.b16 %v282
  %v1319 = vunpack.c.h.b16 %v282
  %v1320 = vunpack.c.l.b16 %v283
  %v1321 = vunpack.c.h.b16 %v283
  %v1322 = vunpack.c.l.b16 %v284
  %v1323 = vunpack.c.h.b16 %v284
  %v1324 = vunpack.c.l.b16 %v285
  %v1325 = vunpack.c.h.b16 %v285
  %v1326 = vunpack.c.l.b16 %v286
  %v1327 = vunpack.c.h.b16 %v286
  %v1328 = vunpack.c.l.b16 %v287
  %v1329 = vunpack.c.h.b16 %v287
  %v1330 = vunpack.c.l.b16 %v288
  %v1331 = vunpack.c.h.b16 %v288
  %v1332 = vunpack.c.l.b16 %v289
  %v1333 = vunpack.c.h.b16 %v289
  %v1334 = vunpack.c.l.b16 %v290
  %v1335 = vunpack.c.h.b16 %v290
  %v1336 = vunpack.c.l.b16 %v291
  %v1337 = vunpack.c.h.b16 %v291
  %v1338 = vunpack.c.l.b16 %v292
  %v1339 = vunpack.c.h.b16 %v292
  %v1340 = vunpack.c.l.b16 %v293
  %v1341 = vunpack.c.h.b16 %v293
  %v1342 = vunpack.c.l.b16 %v294
  %v1343 = vunpack.c.h.b16 %v294
  %v1344 = vunpack.c.l.b16 %v295
  %v1345 = vunpack.c.h.b16 %v295
  %v1346 = vunpack.c.l.b16 %v296
  %v1347 = vunpack.c.h.b16 %v296
  %v1348 = vunpack.c.l.b16 %v297
  %v1349 = vunpack.c.h.b16 %v297
  %v1350 = vunpack.c.l.b16 %v298
  %v1351 = vunpack.c.h.b16 %v298
  %v1352 = vunpack.c.l.b16 %v299
  %v1353 = vunpack.c.h.b16 %v299
  %v1354 = vunpack.c.l.b16 %v300
  %v1355 = vunpack.c.h.b16 %v300
  %v1356 = vunpack.c.l.b16 %v301
  %v1357 = vunpack.c.h.b16 %v301
  %v1358 = vunpack.c.l.b16 %v302
  %v1359 = vunpack.c.h.b16 %v302
  %v1360 = vunpack.c.l.b16 %v303
  %v1361 = vunpack.c.h.b16 %v303
  %v1362 = vunpack.c.l.b16 %v304
  %v1363 = vunpack.c.h.b16 %v304
  %v1364 = vunpack.c.l.b16 %v305
  %v1365 = vunpack.c.h.b16 %v305
  %v1366 = vunpack.c.l.b16 %v306
  %v1367 = vunpack.c.h.b16 %v306
  %v1368 = vunpack.c.l.b16 %v307
  %v1369 = vunpack.c.h.b16 %v307
  %v1370 = vunpack.c.l.b16 %v308
  %v1371 = vunpack.c.h.b16 %v308
  %v1372 = vunpack.c.l.b16 %v309
  %v1373 = vunpack.c.h.b16 %v309
  %v1374 = vunpack.c.l.b16 %v310
  %v1375 = vunpack.c.h.b16 %v310
  %v1376 = vunpack.c.l.b16 %v311
  %v1377 = vunpack.c.h.b16 %v311
  %v1378 = vunpack.c.l.b16 %v312
  %v1379 = vunpack.c.h.b16 %v312
  %v1380 = vunpack.c.l.b16 %v313
  %v1381 = vunpack.c.h.b16 %v313
  %v1382 = vunpack.c.l.b16 %v314
  %v1383 = vunpack.c.h.b16 %v314
  %v1384 = vunpack.c.l.b16 %v315
  %v1385 = vunpack.c.h.b16 %v315
  %v1386 = vunpack.c.l.b16 %v316
  %v1387 = vunpack.c.h.b16 %v316
  %v1388 = vunpack.c.l.b16 %v317
  %v1389 = vunpack.c.h.b16 %v317
  %v1390 = vunpack.c.l.b16 %v318
  %v1391 = vunpack.c.h.b16 %v318
  %v1392 = vunpack.c.l.b16 %v319
  %v1393 = vunpack.c.h.b16 %v319
  %v1394 = vunpack.c.l.b16 %v320
  %v1395 = vunpack.c.h.b16 %v320
  %v1396 = vunpack.c.l.b16 %v321
  %v1397 = vunpack.c.h.b16 %v321
  %v1398 = vunpack.c.l.b16 %v322
  %v1399 = vunpack.c.h.b16 %v322
  %v1400 = vunpack.c.l.b16 %v323
  %v1401 = vunpack.c.h.b16 %v323
  %v1402 = vunpack.c.l.b16 %v324
  %v1403 = vunpack.c.h.b16 %v324
  %v1404 = vunpack.c.l.b16 %v325
  %v1405 = vunpack.c.h.b16 %v325
  %v1406 = vunpack.c.l.b16 %v326
  %v1407 = vunpack.c.h.b16 %v326
  %v1408 = vunpack.c.l.b16 %v327
  %v1409 = vunpack.c.h.b16 %v327
  %v1410 = vunpack.c.l.b16 %v328
  %v1411 = vunpack.c.h.b16 %v328
  %v1412 = vunpack.c.l.b16 %v329
  %v1413 = vunpack.c.h.b16 %v329
  %v1414 = vunpack.c.l.b16 %v330
  %v1415 = vunpack.c.h.b16 %v330
  %v1416 = vunpack.c.l.b16 %v331
  %v1417 = vunpack.c.h.b16 %v331
  %v1418 = vunpack.c.l.b16 %v332
  %v1419 = vunpack.c.h.b16 %v332
  %v1420 = vunpack.c.l.b16 %v333
  %v1421 = vunpack.c.h.b16 %v333
  %v1422 = vunpack.c.l.b16 %v334
  %v1423 = vunpack.c.h.b16 %v334
  %v1424 = vunpack.c.l.b16 %v335
  %v1425 = vunpack.c.h.b16 %v335
  %v1426 = vunpack.c.l.b16 %v336
  %v1427 = vunpack.c.h.b16 %v336
  %v1428 = vunpack.c.l.b16 %v337
  %v1429 = vunpack.c.h.b16 %v337
  %v1430 = vunpack.c.l.b16 %v338
  %v1431 = vunpack.c.h.b16 %v338
  %v1432 = vunpack.c.l.b16 %v339
  %v1433 = vunpack.c.h.b16 %v339
  %v1434 = vunpack.c.l.b16 %v340
  %v1435 = vunpack.c.h.b16 %v340
  %v1436 = vunpack.c.l.b16 %v341
  %v1437 = vunpack.c.h.b16 %v341
  %v1438 = vunpack.c.l.b16 %v342
  %v1439 = vunpack.c.h.b16 %v342
  %v1440 = vunpack.c.l.b16 %v343
  %v1441 = vunpack.c.h.b16 %v343
  %v1442 = vunpack.c.l.b16 %v344
  %v1443 = vunpack.c.h.b16 %v344
  %v1444 = vunpack.c.l.b16 %v345
  %v1445 = vunpack.c.h.b16 %v345
  %v1446 = vunpack.c.l.b16 %v346
  %v1447 = vunpack.c.h.b16 %v346
  %v1448 = vunpack.c.l.b16 %v347
  %v1449 = vunpack.c.h.b16 %v347
  %v1450 = vunpack.c.l.b16 %v348
  %v1451 = vunpack.c.h.b16 %v348
  %v1452 = vunpack.c.l.b16 %v349
  %v1453 = vunpack.c.h.b16 %v349
  %v1454 = vunpack.c.l.b16 %v350
  %v1455 = vunpack.c.h.b16 %v350
  %v1456 = vunpack.c.l.b16 %v351
  %v1457 = vunpack.c.h.b16 %v351
  %v1458 = vunpack.c.l.b16 %v352
  %v1459 = vunpack.c.h.b16 %v352
  %v1460 = vunpack.c.l.b16 %v353
  %v1461 = vunpack.c.h.b16 %v353
  %v1462 = vunpack.c.l.b16 %v354
  %v1463 = vunpack.c.h.b16 %v354
  %v1464 = vunpack.c.l.b16 %v355
  %v1465 = vunpack.c.h.b16 %v355
  %v1466 = vunpack.c.l.b16 %v356
  %v1467 = vunpack.c.h.b16 %v356
  %v1468 = vunpack.c.l.b16 %v357
  %v1469 = vunpack.c.h.b16 %v357
  %v1470 = vunpack.c.l.b16 %v358
  %v1471 = vunpack.c.h.b16 %v358
  %v1472 = vunpack.c.l.b16 %v359
  %v1473 = vunpack.c.h.b16 %v359
  %v1474 = vunpack.c.l.b16 %v360
  %v1475 = vunpack.c.h.b16 %v360
  %v1476 = vunpack.c.l.b16 %v361
  %v1477 = vunpack.c.h.b16 %v361
  %v1478 = vunpack.c.l.b16 %v362
  %v1479 = vunpack.c.h.b16 %v362
  %v1480 = vunpack.c.l.b16 %v363
  %v1481 = vunpack.c.h.b16 %v363
  %v1482 = vunpack.c.l.b16 %v364
  %v1483 = vunpack.c.h.b16 %v364
  %v1484 = vunpack.c.l.b16 %v365
  %v1485 = vunpack.c.h.b16 %v365
  %v1486 = vunpack.c.l.b16 %v366
  %v1487 = vunpack.c.h.b16 %v366
  %v1488 = vunpack.c.l.b16 %v367
  %v1489 = vunpack.c.h.b16 %v367
  %v1490 = vunpack.c.l.b16 %v368
  %v1491 = vunpack.c.h.b16 %v368
  %v1492 = vunpack.c.l.b16 %v369
  %v1493 = vunpack.c.h.b16 %v369
  %v1494 = vunpack.c.l.b16 %v370
  %v1495 = vunpack.c.h.b16 %v370
  %v1496 = vunpack.c.l.b16 %v371
  %v1497 = vunpack.c.h.b16 %v371
  %v1498 = vunpack.c.l.b16 %v372
  %v1499 = vunpack.c.h.b16 %v372
  %v1500 = vunpack.c.l.b16 %v373
  %v1501 = vunpack.c.h.b16 %v373
  %v1502 = vunpack.c.l.b16 %v374
  %v1503 = vunpack.c.h.b16 %v374
  %v1504 = vunpack.c.l.b16 %v375
  %v1505 = vunpack.c.h.b16 %v375
  %v1506 = vunpack.c.l.b16 %v376
  %v1507 = vunpack.c.h.b16 %v376
  %v1508 = vunpack.c.l.b16 %v377
  %v1509 = vunpack.c.h.b16 %v377
  %v1510 = vunpack.c.l.b16 %v378
  %v1511 = vunpack.c.h.b16 %v378
  %v1512 = vunpack.c.l.b16 %v379
  %v1513 = vunpack.c.h.b16 %v379
  %v1514 = vunpack.c.l.b16 %v380
  %v1515 = vunpack.c.h.b16 %v380
  %v1516 = vunpack.c.l.b16 %v381
  %v1517 = vunpack.c.h.b16 %v381
  %v1518 = vunpack.c.l.b16 %v382
  %v1519 = vunpack.c.h.b16 %v382
  %v1520 = vunpack.c.l.b16 %v383
  %v1521 = vunpack.c.h.b16 %v383
  %v1522 = vunpack.c.l.b16 %v384
  %v1523 = vunpack.c.h.b16 %v384
  %v1524 = vunpack.c.l.b16 %v385
  %v1525 = vunpack.c.h.b16 %v385
  %v1526 = vunpack.c.l.b16 %v386
  %v1527 = vunpack.c.h.b16 %v386
  %v1528 = vunpack.c.l.b16 %v387
  %v1529 = vunpack.c.h.b16 %v387
  %v1530 = vunpack.c.l.b16 %v388
  %v1531 = vunpack.c.h.b16 %v388
  %v1532 = vunpack.c.l.b16 %v389
  %v1533 = vunpack.c.h.b16 %v389
  %v1534 = vunpack.c.l.b16 %v390
  %v1535 = vunpack.c.h.b16 %v390
  %v1536 = vunpack.c.l.b16 %v391
  %v1537 = vunpack.c.h.b16 %v391
  %v1538 = vunpack.c.l.b16 %v392
  %v1539 = vunpack.c.h.b16 %v392
  %v1540 = vunpack.c.l.b16 %v393
  %v1541 = vunpack.c.h.b16 %v393
  %v1542 = vunpack.c.l.b16 %v394
  %v1543 = vunpack.c.h.b16 %v394
  %v1544 = vunpack.c.l.b16 %v395
  %v1545 = vunpack.c.h.b16 %v395
  %v1546 = vunpack.c.l.b16 %v396
  %v1547 = vunpack.c.h.b16 %v396
  %v1548 = vunpack.c.l.b16 %v397
  %v1549 = vunpack.c.h.b16 %v397
  %v1550 = vunpack.c.l.b16 %v398
  %v1551 = vunpack.c.h.b16 %v398
  %v1552 = vunpack.c.l.b16 %v399
  %v1553 = vunpack.c.h.b16 %v399
  %v1554 = vunpack.c.l.b16 %v400
  %v1555 = vunpack.c.h.b16 %v400
  %v1556 = vunpack.c.l.b16 %v401
  %v1557 = vunpack.c.h.b16 %v401
  %v1558 = vunpack.c.l.b16 %v402
  %v1559 = vunpack.c.h.b16 %v402
  %v1560 = vunpack.c.l.b16 %v403
  %v1561 = vunpack.c.h.b16 %v403
  %v1562 = vunpack.c.l.b16 %v404
  %v1563 = vunpack.c.h.b16 %v404
  %v1564 = vunpack.c.l.b16 %v405
  %v1565 = vunpack.c.h.b16 %v405
  %v1566 = vunpack.c.l.b16 %v406
  %v1567 = vunpack.c.h.b16 %v406
  %v1568 = vunpack.c.l.b16 %v407
  %v1569 = vunpack.c.h.b16 %v407
  %v1570 = vunpack.c.l.b16 %v408
  %v1571 = vunpack.c.h.b16 %v408
  %v1572 = vunpack.c.l.b16 %v409
  %v1573 = vunpack.c.h.b16 %v409
  %v1574 = vunpack.c.l.b16 %v410
  %v1575 = vunpack.c.h.b16 %v410
  %v1576 = vunpack.c.l.b16 %v411
  %v1577 = vunpack.c.h.b16 %v411
  %v1578 = vunpack.c.l.b16 %v412
  %v1579 = vunpack.c.h.b16 %v412
  %v1580 = vunpack.c.l.b16 %v413
  %v1581 = vunpack.c.h.b16 %v413
  %v1582 = vunpack.c.l.b16 %v414
  %v1583 = vunpack.c.h.b16 %v414
  %v1584 = vunpack.c.l.b16 %v415
  %v1585 = vunpack.c.h.b16 %v415
  %v1586 = vunpack.c.l.b16 %v416
  %v1587 = vunpack.c.h.b16 %v416
  %v1588 = vunpack.c.l.b16 %v417
  %v1589 = vunpack.c.h.b16 %v417
  %v1590 = vunpack.c.l.b16 %v418
  %v1591 = vunpack.c.h.b16 %v418
  %v1592 = vunpack.c.l.b16 %v419
  %v1593 = vunpack.c.h.b16 %v419
  %v1594 = vunpack.c.l.b16 %v420
  %v1595 = vunpack.c.h.b16 %v420
  %v1596 = vunpack.c.l.b16 %v421
  %v1597 = vunpack.c.h.b16 %v421
  %v1598 = vunpack.c.l.b16 %v422
  %v1599 = vunpack.c.h.b16 %v422
  %v1600 = vunpack.c.l.b16 %v423
  %v1601 = vunpack.c.h.b16 %v423
  %v1602 = vunpack.c.l.b16 %v424
  %v1603 = vunpack.c.h.b16 %v424
  %v1604 = vunpack.c.l.b16 %v425
  %v1605 = vunpack.c.h.b16 %v425
  %v1606 = vunpack.c.l.b16 %v426
  %v1607 = vunpack.c.h.b16 %v426
  %v1608 = vunpack.c.l.b16 %v427
  %v1609 = vunpack.c.h.b16 %v427
  %v1610 = vunpack.c.l.b16 %v428
  %v1611 = vunpack.c.h.b16 %v428
  %v1612 = vunpack.c.l.b16 %v429
  %v1613 = vunpack.c.h.b16 %v429
  %v1614 = vunpack.c.l.b16 %v430
  %v1615 = vunpack.c.h.b16 %v430
  %v1616 = vunpack.c.l.b16 %v431
  %v1617 = vunpack.c.h.b16 %v431
  %v1618 = vunpack.c.l.b16 %v432
  %v1619 = vunpack.c.h.b16 %v432
  %v1620 = vunpack.c.l.b16 %v433
  %v1621 = vunpack.c.h.b16 %v433
  %v1622 = vunpack.c.l.b16 %v434
  %v1623 = vunpack.c.h.b16 %v434
  %v1624 = vunpack.c.l.b16 %v435
  %v1625 = vunpack.c.h.b16 %v435
  %v1626 = vunpack.c.l.b16 %v436
  %v1627 = vunpack.c.h.b16 %v436
  %v1628 = vunpack.c.l.b16 %v437
  %v1629 = vunpack.c.h.b16 %v437
  %v1630 = vunpack.c.l.b16 %v438
  %v1631 = vunpack.c.h.b16 %v438
  %v1632 = vunpack.c.l.b16 %v439
  %v1633 = vunpack.c.h.b16 %v439
  %v1634 = vunpack.c.l.b16 %v440
  %v1635 = vunpack.c.h.b16 %v440
  %v1636 = vunpack.c.l.b16 %v441
  %v1637 = vunpack.c.h.b16 %v441
  %v1638 = vunpack.c.l.b16 %v442
  %v1639 = vunpack.c.h.b16 %v442
  %v1640 = vunpack.c.l.b16 %v443
  %v1641 = vunpack.c.h.b16 %v443
  %v1642 = vunpack.c.l.b16 %v444
  %v1643 = vunpack.c.h.b16 %v444
  %v1644 = vunpack.c.l.b16 %v445
  %v1645 = vunpack.c.h.b16 %v445
  %v1646 = vunpack.c.l.b16 %v446
  %v1647 = vunpack.c.h.b16 %v446
  %v1648 = vunpack.c.l.b16 %v447
  %v1649 = vunpack.c.h.b16 %v447
  %v1650 = vunpack.c.l.b16 %v448
  %v1651 = vunpack.c.h.b16 %v448
  %v1652 = vunpack.c.l.b16 %v449
  %v1653 = vunpack.c.h.b16 %v449
  %v1654 = vunpack.c.l.b16 %v450
  %v1655 = vunpack.c.h.b16 %v450
  %v1656 = vunpack.c.l.b16 %v451
  %v1657 = vunpack.c.h.b16 %v451
  %v1658 = vunpack.c.l.b16 %v452
  %v1659 = vunpack.c.h.b16 %v452
  %v1660 = vunpack.c.l.b16 %v453
  %v1661 = vunpack.c.h.b16 %v453
  %v1662 = vunpack.c.l.b16 %v454
  %v1663 = vunpack.c.h.b16 %v454
  %v1664 = vunpack.c.l.b16 %v455
  %v1665 = vunpack.c.h.b16 %v455
  %v1666 = vpack.c.b16 %v870, %v866
  %v1667 = vpack.c.b16 %v871, %v867
  %v1668 = vpack.c.b16 %v872, %v868
  %v1669 = vpack.c.b16 %v873, %v869
  %v1670 = vpack.c.b16 %v878, %v874
  %v1671 = vpack.c.b16 %v879, %v875
  %v1672 = vpack.c.b16 %v880, %v876
  %v1673 = vpack.c.b16 %v881, %v877
  %v1674 = vpack.c.b16 %v886, %v882
  %v1675 = vpack.c.b16 %v887, %v883
  %v1676 = vpack.c.b16 %v888, %v884
  %v1677 = vpack.c.b16 %v889, %v885
  %v1678 = vpack.c.b16 %v894, %v890
  %v1679 = vpack.c.b16 %v895, %v891
  %v1680 = vpack.c.b16 %v896, %v892
  %v1681 = vpack.c.b16 %v897, %v893
  %v1682 = vpack.c.b16 %v902, %v898
  %v1683 = vpack.c.b16 %v903, %v899
  %v1684 = vpack.c.b16 %v904, %v900
  %v1685 = vpack.c.b16 %v905, %v901
  %v1686 = vpack.c.b16 %v910, %v906
  %v1687 = vpack.c.b16 %v911, %v907
  %v1688 = vpack.c.b16 %v912, %v908
  %v1689 = vpack.c.b16 %v913, %v909
  %v1690 = vpack.c.b16 %v918, %v914
  %v1691 = vpack.c.b16 %v919, %v915
  %v1692 = vpack.c.b16 %v920, %v916
  %v1693 = vpack.c.b16 %v921, %v917
  %v1694 = vpack.c.b16 %v926, %v922
  %v1695 = vpack.c.b16 %v927, %v923
  %v1696 = vpack.c.b16 %v928, %v924
  %v1697 = vpack.c.b16 %v929, %v925
  %v1698 = vpack.c.b16 %v934, %v930
  %v1699 = vpack.c.b16 %v935, %v931
  %v1700 = vpack.c.b16 %v936, %v932
  %v1701 = vpack.c.b16 %v937, %v933
  %v1702 = vpack.c.b16 %v942, %v938
  %v1703 = vpack.c.b16 %v943, %v939
  %v1704 = vpack.c.b16 %v944, %v940
  %v1705 = vpack.c.b16 %v945, %v941
  %v1706 = vpack.c.b16 %v950, %v946
  %v1707 = vpack.c.b16 %v951, %v947
  %v1708 = vpack.c.b16 %v952, %v948
  %v1709 = vpack.c.b16 %v953, %v949
  %v1710 = vpack.c.b16 %v958, %v954
  %v1711 = vpack.c.b16 %v959, %v955
  %v1712 = vpack.c.b16 %v960, %v956
  %v1713 = vpack.c.b16 %v961, %v957
  %v1714 = vpack.c.b16 %v966, %v962
  %v1715 = vpack.c.b16 %v967, %v963
  %v1716 = vpack.c.b16 %v968, %v964
  %v1717 = vpack.c.b16 %v969, %v965
  %v1718 = vpack.c.b16 %v974, %v970
  %v1719 = vpack.c.b16 %v975, %v971
  %v1720 = vpack.c.b16 %v976, %v972
  %v1721 = vpack.c.b16 %v977, %v973
  %v1722 = vpack.c.b16 %v982, %v978
  %v1723 = vpack.c.b16 %v983, %v979
  %v1724 = vpack.c.b16 %v984, %v980
  %v1725 = vpack.c.b16 %v985, %v981
  %v1726 = vpack.c.b16 %v990, %v986
  %v1727 = vpack.c.b16 %v991, %v987
  %v1728 = vpack.c.b16 %v992, %v988
  %v1729 = vpack.c.b16 %v993, %v989
  %v1730 = vpack.c.b16 %v998, %v994
  %v1731 = vpack.c.b16 %v999, %v995
  %v1732 = vpack.c.b16 %v1000, %v996
  %v1733 = vpack.c.b16 %v1001, %v997
  %v1734 = vpack.c.b16 %v1006, %v1002
  %v1735 = vpack.c.b16 %v1007, %v1003
  %v1736 = vpack.c.b16 %v1008, %v1004
  %v1737 = vpack.c.b16 %v1009, %v1005
  %v1738 = vpack.c.b16 %v1014, %v1010
  %v1739 = vpack.c.b16 %v1015, %v1011
  %v1740 = vpack.c.b16 %v1016, %v1012
  %v1741 = vpack.c.b16 %v1017, %v1013
  %v1742 = vpack.c.b16 %v1022, %v1018
  %v1743 = vpack.c.b16 %v1023, %v1019
  %v1744 = vpack.c.b16 %v1024, %v1020
  %v1745 = vpack.c.b16 %v1025, %v1021
  %v1746 = vpack.c.b16 %v1030, %v1026
  %v1747 = vpack.c.b16 %v1031, %v1027
  %v1748 = vpack.c.b16 %v1032, %v1028
  %v1749 = vpack.c.b16 %v1033, %v1029
  %v1750 = vpack.c.b16 %v1038, %v1034
  %v1751 = vpack.c.b16 %v1039, %v1035
  %v1752 = vpack.c.b16 %v1040, %v1036
  %v1753 = vpack.c.b16 %v1041, %v1037
  %v1754 = vpack.c.b16 %v1046, %v1042
  %v1755 = vpack.c.b16 %v1047, %v1043
  %v1756 = vpack.c.b16 %v1048, %v1044
  %v1757 = vpack.c.b16 %v1049, %v1045
  %v1758 = vpack.c.b16 %v1054, %v1050
  %v1759 = vpack.c.b16 %v1055, %v1051
  %v1760 = vpack.c.b16 %v1056, %v1052
  %v1761 = vpack.c.b16 %v1057, %v1053
  %v1762 = vpack.c.b16 %v1062, %v1058
  %v1763 = vpack.c.b16 %v1063, %v1059
  %v1764 = vpack.c.b16 %v1064, %v1060
  %v1765 = vpack.c.b16 %v1065, %v1061
  %v1766 = vpack.c.b16 %v1070, %v1066
  %v1767 = vpack.c.b16 %v1071, %v1067
  %v1768 = vpack.c.b16 %v1072, %v1068
  %v1769 = vpack.c.b16 %v1073, %v1069
  %v1770 = vpack.c.b16 %v1078, %v1074
  %v1771 = vpack.c.b16 %v1079, %v1075
  %v1772 = vpack.c.b16 %v1080, %v1076
  %v1773 = vpack.c.b16 %v1081, %v1077
  %v1774 = vpack.c.b16 %v1086, %v1082
  %v1775 = vpack.c.b16 %v1087, %v1083
  %v1776 = vpack.c.b16 %v1088, %v1084
  %v1777 = vpack.c.b16 %v1089, %v1085
  %v1778 = vpack.c.b16 %v1094, %v1090
  %v1779 = vpack.c.b16 %v1095, %v1091
  %v1780 = vpack.c.b16 %v1096, %v1092
  %v1781 = vpack.c.b16 %v1097, %v1093
  %v1782 = vpack.c.b16 %v1102, %v1098
  %v1783 = vpack.c.b16 %v1103, %v1099
  %v1784 = vpack.c.b16 %v1104, %v1100
  %v1785 = vpack.c.b16 %v1105, %v1101
  %v1786 = vpack.c.b16 %v1110, %v1106
  %v1787 = vpack.c.b16 %v1111, %v1107
  %v1788 = vpack.c.b16 %v1112, %v1108
  %v1789 = vpack.c.b16 %v1113, %v1109
  %v1790 = vpack.c.b16 %v1118, %v1114
  %v1791 = vpack.c.b16 %v1119, %v1115
  %v1792 = vpack.c.b16 %v1120, %v1116
  %v1793 = vpack.c.b16 %v1121, %v1117
  %v1794 = vpack.c.b16 %v1126, %v1122
  %v1795 = vpack.c.b16 %v1127, %v1123
  %v1796 = vpack.c.b16 %v1128, %v1124
  %v1797 = vpack.c.b16 %v1129, %v1125
  %v1798 = vpack.c.b16 %v1134, %v1130
  %v1799 = vpack.c.b16 %v1135, %v1131
  %v1800 = vpack.c.b16 %v1136, %v1132
  %v1801 = vpack.c.b16 %v1137, %v1133
  %v1802 = vpack.c.b16 %v1142, %v1138
  %v1803 = vpack.c.b16 %v1143, %v1139
  %v1804 = vpack.c.b16 %v1144, %v1140
  %v1805 = vpack.c.b16 %v1145, %v1141
  %v1806 = vpack.c.b16 %v1150, %v1146
  %v1807 = vpack.c.b16 %v1151, %v1147
  %v1808 = vpack.c.b16 %v1152, %v1148
  %v1809 = vpack.c.b16 %v1153, %v1149
  %v1810 = vpack.c.b16 %v1158, %v1154
  %v1811 = vpack.c.b16 %v1159, %v1155
  %v1812 = vpack.c.b16 %v1160, %v1156
  %v1813 = vpack.c.b16 %v1161, %v1157
  %v1814 = vpack.c.b16 %v1166, %v1162
  %v1815 = vpack.c.b16 %v1167, %v1163
  %v1816 = vpack.c.b16 %v1168, %v1164
  %v1817 = vpack.c.b16 %v1169, %v1165
  %v1818 = vpack.c.b16 %v1174, %v1170
  %v1819 = vpack.c.b16 %v1175, %v1171
  %v1820 = vpack.c.b16 %v1176, %v1172
  %v1821 = vpack.c.b16 %v1177, %v1173
  %v1822 = vpack.c.b16 %v1182, %v1178
  %v1823 = vpack.c.b16 %v1183, %v1179
  %v1824 = vpack.c.b16 %v1184, %v1180
  %v1825 = vpack.c.b16 %v1185, %v1181
  %v1826 = vpack.c.b16 %v1190, %v1186
  %v1827 = vpack.c.b16 %v1191, %v1187
  %v1828 = vpack.c.b16 %v1192, %v1188
  %v1829 = vpack.c.b16 %v1193, %v1189
  %v1830 = vpack.c.b16 %v1198, %v1194
  %v1831 = vpack.c.b16 %v1199, %v1195
  %v1832 = vpack.c.b16 %v1200, %v1196
  %v1833 = vpack.c.b16 %v1201, %v1197
  %v1834 = vpack.c.b16 %v1206, %v1202
  %v1835 = vpack.c.b16 %v1207, %v1203
  %v1836 = vpack.c.b16 %v1208, %v1204
  %v1837 = vpack.c.b16 %v1209, %v1205
  %v1838 = vpack.c.b16 %v1214, %v1210
  %v1839 = vpack.c.b16 %v1215, %v1211
  %v1840 = vpack.c.b16 %v1216, %v1212
  %v1841 = vpack.c.b16 %v1217, %v1213
  %v1842 = vpack.c.b16 %v1222, %v1218
  %v1843 = vpack.c.b16 %v1223, %v1219
  %v1844 = vpack.c.b16 %v1224, %v1220
  %v1845 = vpack.c.b16 %v1225, %v1221
  %v1846 = vpack.c.b16 %v1230, %v1226
  %v1847 = vpack.c.b16 %v1231, %v1227
  %v1848 = vpack.c.b16 %v1232, %v1228
  %v1849 = vpack.c.b16 %v1233, %v1229
  %v1850 = vpack.c.b16 %v1238, %v1234
  %v1851 = vpack.c.b16 %v1239, %v1235
  %v1852 = vpack.c.b16 %v1240, %v1236
  %v1853 = vpack.c.b16 %v1241, %v1237
  %v1854 = vpack.c.b16 %v1246, %v1242
  %v1855 = vpack.c.b16 %v1247, %v1243
  %v1856 = vpack.c.b16 %v1248, %v1244
  %v1857 = vpack.c.b16 %v1249, %v1245
  %v1858 = vpack.c.b16 %v1254, %v1250
  %v1859 = vpack.c.b16 %v1255, %v1251
  %v1860 = vpack.c.b16 %v1256, %v1252
  %v1861 = vpack.c.b16 %v1257, %v1253
  %v1862 = vpack.c.b16 %v1262, %v1258
  %v1863 = vpack.c.b16 %v1263, %v1259
  %v1864 = vpack.c.b16 %v1264, %v1260
  %v1865 = vpack.c.b16 %v1265, %v1261
  %v1866 = vpack.c.b16 %v1270, %v1266
  %v1867 = vpack.c.b16 %v1271, %v1267
  %v1868 = vpack.c.b16 %v1272, %v1268
  %v1869 = vpack.c.b16 %v1273, %v1269
  %v1870 = vpack.c.b16 %v1278, %v1274
  %v1871 = vpack.c.b16 %v1279, %v1275
  %v1872 = vpack.c.b16 %v1280, %v1276
  %v1873 = vpack.c.b16 %v1281, %v1277
  %v1874 = vpack.c.b16 %v1286, %v1282
  %v1875 = vpack.c.b16 %v1287, %v1283
  %v1876 = vpack.c.b16 %v1288, %v1284
  %v1877 = vpack.c.b16 %v1289, %v1285
  %v1878 = vpack.c.b16 %v1294, %v1290
  %v1879 = vpack.c.b16 %v1295, %v1291
  %v1880 = vpack.c.b16 %v1296, %v1292
  %v1881 = vpack.c.b16 %v1297, %v1293
  %v1882 = vpack.c.b16 %v1302, %v1298
  %v1883 = vpack.c.b16 %v1303, %v1299
  %v1884 = vpack.c.b16 %v1304, %v1300
  %v1885 = vpack.c.b16 %v1305, %v1301
  %v1886 = vpack.c.b16 %v1310, %v1306
  %v1887 = vpack.c.b16 %v1311, %v1307
  %v1888 = vpack.c.b16 %v1312, %v1308
  %v1889 = vpack.c.b16 %v1313, %v1309
  %v1890 = vpack.c.b16 %v1318, %v1314
  %v1891 = vpack.c.b16 %v1319, %v1315
  %v1892 = vpack.c.b16 %v1320, %v1316
  %v1893 = vpack.c.b16 %v1321, %v1317
  %v1894 = vpack.c.b16 %v1326, %v1322
  %v1895 = vpack.c.b16 %v1327, %v1323
  %v1896 = vpack.c.b16 %v1328, %v1324
  %v1897 = vpack.c.b16 %v1329, %v1325
  %v1898 = vpack.c.b16 %v1334, %v1330
  %v1899 = vpack.c.b16 %v1335, %v1331
  %v1900 = vpack.c.b16 %v1336, %v1332
  %v1901 = vpack.c.b16 %v1337, %v1333
  %v1902 = vpack.c.b16 %v1342, %v1338
  %v1903 = vpack.c.b16 %v1343, %v1339
  %v1904 = vpack.c.b16 %v1344, %v1340
  %v1905 = vpack.c.b16 %v1345, %v1341
  %v1906 = vpack.c.b16 %v1350, %v1346
  %v1907 = vpack.c.b16 %v1351, %v1347
  %v1908 = vpack.c.b16 %v1352, %v1348
  %v1909 = vpack.c.b16 %v1353, %v1349
  %v1910 = vpack.c.b16 %v1358, %v1354
  %v1911 = vpack.c.b16 %v1359, %v1355
  %v1912 = vpack.c.b16 %v1360, %v1356
  %v1913 = vpack.c.b16 %v1361, %v1357
  %v1914 = vpack.c.b16 %v1366, %v1362
  %v1915 = vpack.c.b16 %v1367, %v1363
  %v1916 = vpack.c.b16 %v1368, %v1364
  %v1917 = vpack.c.b16 %v1369, %v1365
  %v1918 = vpack.c.b16 %v1374, %v1370
  %v1919 = vpack.c.b16 %v1375, %v1371
  %v1920 = vpack.c.b16 %v1376, %v1372
  %v1921 = vpack.c.b16 %v1377, %v1373
  %v1922 = vpack.c.b16 %v1382, %v1378
  %v1923 = vpack.c.b16 %v1383, %v1379
  %v1924 = vpack.c.b16 %v1384, %v1380
  %v1925 = vpack.c.b16 %v1385, %v1381
  %v1926 = vpack.c.b16 %v1390, %v1386
  %v1927 = vpack.c.b16 %v1391, %v1387
  %v1928 = vpack.c.b16 %v1392, %v1388
  %v1929 = vpack.c.b16 %v1393, %v1389
  %v1930 = vpack.c.b16 %v1398, %v1394
  %v1931 = vpack.c.b16 %v1399, %v1395
  %v1932 = vpack.c.b16 %v1400, %v1396
  %v1933 = vpack.c.b16 %v1401, %v1397
  %v1934 = vpack.c.b16 %v1406, %v1402
  %v1935 = vpack.c.b16 %v1407, %v1403
  %v1936 = vpack.c.b16 %v1408, %v1404
  %v1937 = vpack.c.b16 %v1409, %v1405
  %v1938 = vpack.c.b16 %v1414, %v1410
  %v1939 = vpack.c.b16 %v1415, %v1411
  %v1940 = vpack.c.b16 %v1416, %v1412
  %v1941 = vpack.c.b16 %v1417, %v1413
  %v1942 = vpack.c.b16 %v1422, %v1418
  %v1943 = vpack.c.b16 %v1423, %v1419
  %v1944 = vpack.c.b16 %v1424, %v1420
  %v1945 = vpack.c.b16 %v1425, %v1421
  %v1946 = vpack.c.b16 %v1430, %v1426
  %v1947 = vpack.c.b16 %v1431, %v1427
  %v1948 = vpack.c.b16 %v1432, %v1428
  %v1949 = vpack.c.b16 %v1433, %v1429
  %v1950 = vpack.c.b16 %v1438, %v1434
  %v1951 = vpack.c.b16 %v1439, %v1435
  %v1952 = vpack.c.b16 %v1440, %v1436
  %v1953 = vpack.c.b16 %v1441, %v1437
  %v1954 = vpack.c.b16 %v1446, %v1442
  %v1955 = vpack.c.b16 %v1447, %v1443
  %v1956 = vpack.c.b16 %v1448, %v1444
  %v1957 = vpack.c.b16 %v1449, %v1445
  %v1958 = vpack.c.b16 %v1454, %v1450
  %v1959 = vpack.c.b16 %v1455, %v1451
  %v1960 = vpack.c.b16 %v1456, %v1452
  %v1961 = vpack.c.b16 %v1457, %v1453
  %v1962 = vpack.c.b16 %v1462, %v1458
  %v1963 = vpack.c.b16 %v1463, %v1459
  %v1964 = vpack.c.b16 %v1464, %v1460
  %v1965 = vpack.c.b16 %v1465, %v1461
  %v1966 = vpack.c.b16 %v1470, %v1466
  %v1967 = vpack.c.b16 %v1471, %v1467
  %v1968 = vpack.c.b16 %v1472, %v1468
  %v1969 = vpack.c.b16 %v1473, %v1469
  %v1970 = vpack.c.b16 %v1478, %v1474
  %v1971 = vpack.c.b16 %v1479, %v1475
  %v1972 = vpack.c.b16 %v1480, %v1476
  %v1973 = vpack.c.b16 %v1481, %v1477
  %v1974 = vpack.c.b16 %v1486, %v1482
  %v1975 = vpack.c.b16 %v1487, %v1483
  %v1976 = vpack.c.b16 %v1488, %v1484
  %v1977 = vpack.c.b16 %v1489, %v1485
  %v1978 = vpack.c.b16 %v1494, %v1490
  %v1979 = vpack.c.b16 %v1495, %v1491
  %v1980 = vpack.c.b16 %v1496, %v1492
  %v1981 = vpack.c.b16 %v1497, %v1493
  %v1982 = vpack.c.b16 %v1502, %v1498
  %v1983 = vpack.c.b16 %v1503, %v1499
  %v1984 = vpack.c.b16 %v1504, %v1500
  %v1985 = vpack.c.b16 %v1505, %v1501
  %v1986 = vpack.c.b16 %v1510, %v1506
  %v1987 = vpack.c.b16 %v1511, %v1507
  %v1988 = vpack.c.b16 %v1512, %v1508
  %v1989 = vpack.c.b16 %v1513, %v1509
  %v1990 = vpack.c.b16 %v1518, %v1514
  %v1991 = vpack.c.b16 %v1519, %v1515
  %v1992 = vpack.c.b16 %v1520, %v1516
  %v1993 = vpack.c.b16 %v1521, %v1517
  %v1994 = vpack.c.b16 %v1526, %v1522
  %v1995 = vpack.c.b16 %v1527, %v1523
  %v1996 = vpack.c.b16 %v1528, %v1524
  %v1997 = vpack.c.b16 %v1529, %v1525
  %v1998 = vpack.c.b16 %v1534, %v1530
  %v1999 = vpack.c.b16 %v1535, %v1531
  %v2000 = vpack.c.b16 %v1536, %v1532
  %v2001 = vpack.c.b16 %v1537, %v1533
  %v2002 = vpack.c.b16 %v1542, %v1538
  %v2003 = vpack.c.b16 %v1543, %v1539
  %v2004 = vpack.c.b16 %v1544, %v1540
  %v2005 = vpack.c.b16 %v1545, %v1541
  %v2006 = vpack.c.b16 %v1550, %v1546
  %v2007 = vpack.c.b16 %v1551, %v1547
  %v2008 = vpack.c.b16 %v1552, %v1548
  %v2009 = vpack.c.b16 %v1553, %v1549
  %v2010 = vpack.c.b16 %v1558, %v1554
  %v2011 = vpack.c.b16 %v1559, %v1555
  %v2012 = vpack.c.b16 %v1560, %v1556
  %v2013 = vpack.c.b16 %v1561, %v1557
  %v2014 = vpack.c.b16 %v1566, %v1562
  %v2015 = vpack.c.b16 %v1567, %v1563
  %v2016 = vpack.c.b16 %v1568, %v1564
  %v2017 = vpack.c.b16 %v1569, %v1565
  %v2018 = vpack.c.b16 %v1574, %v1570
  %v2019 = vpack.c.b16 %v1575, %v1571
  %v2020 = vpack.c.b16 %v1576, %v1572
  %v2021 = vpack.c.b16 %v1577, %v1573
  %v2022 = vpack.c.b16 %v1582, %v1578
  %v2023 = vpack.c.b16 %v1583, %v1579
  %v2024 = vpack.c.b16 %v1584, %v1580
  %v2025 = vpack.c.b16 %v1585, %v1581
  %v2026 = vpack.c.b16 %v1590, %v1586
  %v2027 = vpack.c.b16 %v1591, %v1587
  %v2028 = vpack.c.b16 %v1592, %v1588
  %v2029 = vpack.c.b16 %v1593, %v1589
  %v2030 = vpack.c.b16 %v1598, %v1594
  %v2031 = vpack.c.b16 %v1599, %v1595
  %v2032 = vpack.c.b16 %v1600, %v1596
  %v2033 = vpack.c.b16 %v1601, %v1597
  %v2034 = vpack.c.b16 %v1606, %v1602
  %v2035 = vpack.c.b16 %v1607, %v1603
  %v2036 = vpack.c.b16 %v1608, %v1604
  %v2037 = vpack.c.b16 %v1609, %v1605
  %v2038 = vpack.c.b16 %v1614, %v1610
  %v2039 = vpack.c.b16 %v1615, %v1611
  %v2040 = vpack.c.b16 %v1616, %v1612
  %v2041 = vpack.c.b16 %v1617, %v1613
  %v2042 = vpack.c.b16 %v1622, %v1618
  %v2043 = vpack.c.b16 %v1623, %v1619
  %v2044 = vpack.c.b16 %v1624, %v1620
  %v2045 = vpack.c.b16 %v1625, %v1621
  %v2046 = vpack.c.b16 %v1630, %v1626
  %v2047 = vpack.c.b16 %v1631, %v1627
  %v2048 = vpack.c.b16 %v1632, %v1628
  %v2049 = vpack.c.b16 %v1633, %v1629
  %v2050 = vpack.c.b16 %v1638, %v1634
  %v2051 = vpack.c.b16 %v1639, %v1635
  %v2052 = vpack.c.b16 %v1640, %v1636
  %v2053 = vpack.c.b16 %v1641, %v1637
  %v2054 = vpack.c.b16 %v1646, %v1642
  %v2055 = vpack.c.b16 %v1647, %v1643
  %v2056 = vpack.c.b16 %v1648, %v1644
  %v2057 = vpack.c.b16 %v1649, %v1645
  %v2058 = vpack.c.b16 %v1654, %v1650
  %v2059 = vpack.c.b16 %v1655, %v1651
  %v2060 = vpack.c.b16 %v1656, %v1652
  %v2061 = vpack.c.b16 %v1657, %v1653
  %v2062 = vpack.c.b16 %v1662, %v1658
  %v2063 = vpack.c.b16 %v1663, %v1659
  %v2064 = vpack.c.b16 %v1664, %v1660
  %v2065 = vpack.c.b16 %v1665, %v1661
  %vm2466 = vcmask 523264
  %v2468 = vsel %vm2466, %v55, 0
  %2470 = vmatpush.bf16.msra.mxu0 %v1694
  %2471 = vmatpush.bf16.msra.mxu0 %v1690
  %2472 = vmatpush.bf16.msra.mxu0 %v1686
  %2473 = vmatpush.bf16.msra.mxu0 %v1682
  %2474 = vmatpush.bf16.msra.mxu0 %v1678
  %2475 = vmatpush.bf16.msra.mxu0 %v1674
  %2476 = vmatpush.bf16.msra.mxu0 %v1670
  %2477 = vmatpush.bf16.msra.mxu0 %v1666
  %2478 = vmatmul.bf16.gmra.mxu0 %v43
  %v2479 = vpop.f32.mrf.mxu0
  %v2480 = vadd.f32 %v458, %v2479
  %v2481 = vpop.f32.mrf.mxu0
  %2482 = vdwg.mxu0
  %2483 = vmatpush.bf16.msra.mxu0 %v1726
  %2484 = vmatpush.bf16.msra.mxu0 %v1722
  %2485 = vmatpush.bf16.msra.mxu0 %v1718
  %2486 = vmatpush.bf16.msra.mxu0 %v1714
  %2487 = vmatpush.bf16.msra.mxu0 %v1710
  %2488 = vmatpush.bf16.msra.mxu0 %v1706
  %2489 = vmatpush.bf16.msra.mxu0 %v1702
  %2490 = vmatpush.bf16.msra.mxu0 %v1698
  %2491 = vmatmul.bf16.gmra.mxu0 %v44
  %v2492 = vpop.f32.mrf.mxu0
  %v2493 = vadd.f32 %v2480, %v2492
  %v2494 = vpop.f32.mrf.mxu0
  %2495 = vdwg.mxu0
  %2496 = vmatpush.bf16.msra.mxu0 %v1758
  %2497 = vmatpush.bf16.msra.mxu0 %v1754
  %2498 = vmatpush.bf16.msra.mxu0 %v1750
  %2499 = vmatpush.bf16.msra.mxu0 %v1746
  %2500 = vmatpush.bf16.msra.mxu0 %v1742
  %2501 = vmatpush.bf16.msra.mxu0 %v1738
  %2502 = vmatpush.bf16.msra.mxu0 %v1734
  %2503 = vmatpush.bf16.msra.mxu0 %v1730
  %2504 = vmatmul.bf16.gmra.mxu0 %v45
  %v2505 = vpop.f32.mrf.mxu0
  %v2506 = vadd.f32 %v2493, %v2505
  %v2507 = vpop.f32.mrf.mxu0
  %2508 = vdwg.mxu0
  %2509 = vmatpush.bf16.msra.mxu0 %v1790
  %2510 = vmatpush.bf16.msra.mxu0 %v1786
  %2511 = vmatpush.bf16.msra.mxu0 %v1782
  %2512 = vmatpush.bf16.msra.mxu0 %v1778
  %2513 = vmatpush.bf16.msra.mxu0 %v1774
  %2514 = vmatpush.bf16.msra.mxu0 %v1770
  %2515 = vmatpush.bf16.msra.mxu0 %v1766
  %2516 = vmatpush.bf16.msra.mxu0 %v1762
  %2517 = vmatmul.bf16.gmra.mxu0 %v46
  %v2518 = vpop.f32.mrf.mxu0
  %v2519 = vadd.f32 %v2506, %v2518
  %v2520 = vpop.f32.mrf.mxu0
  %2521 = vdwg.mxu0
  %2522 = vmatpush.bf16.msra.mxu0 %v1822
  %2523 = vmatpush.bf16.msra.mxu0 %v1818
  %2524 = vmatpush.bf16.msra.mxu0 %v1814
  %2525 = vmatpush.bf16.msra.mxu0 %v1810
  %2526 = vmatpush.bf16.msra.mxu0 %v1806
  %2527 = vmatpush.bf16.msra.mxu0 %v1802
  %2528 = vmatpush.bf16.msra.mxu0 %v1798
  %2529 = vmatpush.bf16.msra.mxu0 %v1794
  %2530 = vmatmul.bf16.gmra.mxu0 %v47
  %v2531 = vpop.f32.mrf.mxu0
  %v2532 = vadd.f32 %v2519, %v2531
  %v2533 = vpop.f32.mrf.mxu0
  %2534 = vdwg.mxu0
  %2535 = vmatpush.bf16.msra.mxu0 %v1854
  %2536 = vmatpush.bf16.msra.mxu0 %v1850
  %2537 = vmatpush.bf16.msra.mxu0 %v1846
  %2538 = vmatpush.bf16.msra.mxu0 %v1842
  %2539 = vmatpush.bf16.msra.mxu0 %v1838
  %2540 = vmatpush.bf16.msra.mxu0 %v1834
  %2541 = vmatpush.bf16.msra.mxu0 %v1830
  %2542 = vmatpush.bf16.msra.mxu0 %v1826
  %2543 = vmatmul.bf16.gmra.mxu0 %v48
  %v2544 = vpop.f32.mrf.mxu0
  %v2545 = vadd.f32 %v2532, %v2544
  %v2546 = vpop.f32.mrf.mxu0
  %2547 = vdwg.mxu0
  %2548 = vmatpush.bf16.msra.mxu0 %v1886
  %2549 = vmatpush.bf16.msra.mxu0 %v1882
  %2550 = vmatpush.bf16.msra.mxu0 %v1878
  %2551 = vmatpush.bf16.msra.mxu0 %v1874
  %2552 = vmatpush.bf16.msra.mxu0 %v1870
  %2553 = vmatpush.bf16.msra.mxu0 %v1866
  %2554 = vmatpush.bf16.msra.mxu0 %v1862
  %2555 = vmatpush.bf16.msra.mxu0 %v1858
  %2556 = vmatmul.bf16.gmra.mxu0 %v49
  %v2557 = vpop.f32.mrf.mxu0
  %v2558 = vadd.f32 %v2545, %v2557
  %v2559 = vpop.f32.mrf.mxu0
  %2560 = vdwg.mxu0
  %2561 = vmatpush.bf16.msra.mxu0 %v1918
  %2562 = vmatpush.bf16.msra.mxu0 %v1914
  %2563 = vmatpush.bf16.msra.mxu0 %v1910
  %2564 = vmatpush.bf16.msra.mxu0 %v1906
  %2565 = vmatpush.bf16.msra.mxu0 %v1902
  %2566 = vmatpush.bf16.msra.mxu0 %v1898
  %2567 = vmatpush.bf16.msra.mxu0 %v1894
  %2568 = vmatpush.bf16.msra.mxu0 %v1890
  %2569 = vmatmul.bf16.gmra.mxu0 %v50
  %v2570 = vpop.f32.mrf.mxu0
  %v2571 = vadd.f32 %v2558, %v2570
  %v2572 = vpop.f32.mrf.mxu0
  %2573 = vdwg.mxu0
  %2574 = vmatpush.bf16.msra.mxu0 %v1950
  %2575 = vmatpush.bf16.msra.mxu0 %v1946
  %2576 = vmatpush.bf16.msra.mxu0 %v1942
  %2577 = vmatpush.bf16.msra.mxu0 %v1938
  %2578 = vmatpush.bf16.msra.mxu0 %v1934
  %2579 = vmatpush.bf16.msra.mxu0 %v1930
  %2580 = vmatpush.bf16.msra.mxu0 %v1926
  %2581 = vmatpush.bf16.msra.mxu0 %v1922
  %2582 = vmatmul.bf16.gmra.mxu0 %v51
  %v2583 = vpop.f32.mrf.mxu0
  %v2584 = vadd.f32 %v2571, %v2583
  %v2585 = vpop.f32.mrf.mxu0
  %2586 = vdwg.mxu0
  %2587 = vmatpush.bf16.msra.mxu0 %v1982
  %2588 = vmatpush.bf16.msra.mxu0 %v1978
  %2589 = vmatpush.bf16.msra.mxu0 %v1974
  %2590 = vmatpush.bf16.msra.mxu0 %v1970
  %2591 = vmatpush.bf16.msra.mxu0 %v1966
  %2592 = vmatpush.bf16.msra.mxu0 %v1962
  %2593 = vmatpush.bf16.msra.mxu0 %v1958
  %2594 = vmatpush.bf16.msra.mxu0 %v1954
  %2595 = vmatmul.bf16.gmra.mxu0 %v52
  %v2596 = vpop.f32.mrf.mxu0
  %v2597 = vadd.f32 %v2584, %v2596
  %v2598 = vpop.f32.mrf.mxu0
  %2599 = vdwg.mxu0
  %2600 = vmatpush.bf16.msra.mxu0 %v2014
  %2601 = vmatpush.bf16.msra.mxu0 %v2010
  %2602 = vmatpush.bf16.msra.mxu0 %v2006
  %2603 = vmatpush.bf16.msra.mxu0 %v2002
  %2604 = vmatpush.bf16.msra.mxu0 %v1998
  %2605 = vmatpush.bf16.msra.mxu0 %v1994
  %2606 = vmatpush.bf16.msra.mxu0 %v1990
  %2607 = vmatpush.bf16.msra.mxu0 %v1986
  %2608 = vmatmul.bf16.gmra.mxu0 %v53
  %v2609 = vpop.f32.mrf.mxu0
  %v2610 = vadd.f32 %v2597, %v2609
  %v2611 = vpop.f32.mrf.mxu0
  %2612 = vdwg.mxu0
  %2613 = vmatpush.bf16.msra.mxu0 %v2046
  %2614 = vmatpush.bf16.msra.mxu0 %v2042
  %2615 = vmatpush.bf16.msra.mxu0 %v2038
  %2616 = vmatpush.bf16.msra.mxu0 %v2034
  %2617 = vmatpush.bf16.msra.mxu0 %v2030
  %2618 = vmatpush.bf16.msra.mxu0 %v2026
  %2619 = vmatpush.bf16.msra.mxu0 %v2022
  %2620 = vmatpush.bf16.msra.mxu0 %v2018
  %2621 = vmatmul.bf16.gmra.mxu0 %v54
  %v2622 = vpop.f32.mrf.mxu0
  %v2623 = vadd.f32 %v2610, %v2622
  %v2624 = vpop.f32.mrf.mxu0
  %2625 = vdwg.mxu0
  %2626 = vmatpush.bf16.msra.mxu0 0
  %2627 = vmatpush.bf16.msra.mxu0 0
  %2628 = vmatpush.bf16.msra.mxu0 0
  %2629 = vmatpush.bf16.msra.mxu0 0
  %2630 = vmatpush.bf16.msra.mxu0 %v2062
  %2631 = vmatpush.bf16.msra.mxu0 %v2058
  %2632 = vmatpush.bf16.msra.mxu0 %v2054
  %2633 = vmatpush.bf16.msra.mxu0 %v2050
  %2634 = vmatmul.bf16.gmra.mxu0 %v2468
  %v2635 = vpop.f32.mrf.mxu0
  %v2636 = vadd.f32 %v2623, %v2635
  %v2637 = vpop.f32.mrf.mxu0
  %2638 = vdwg.mxu0
  %2639 = vmatpush.bf16.msra.mxu0 %v1695
  %2640 = vmatpush.bf16.msra.mxu0 %v1691
  %2641 = vmatpush.bf16.msra.mxu0 %v1687
  %2642 = vmatpush.bf16.msra.mxu0 %v1683
  %2643 = vmatpush.bf16.msra.mxu0 %v1679
  %2644 = vmatpush.bf16.msra.mxu0 %v1675
  %2645 = vmatpush.bf16.msra.mxu0 %v1671
  %2646 = vmatpush.bf16.msra.mxu0 %v1667
  %2647 = vmatmul.bf16.gmra.mxu0 %v43
  %v2648 = vpop.f32.mrf.mxu0
  %v2649 = vadd.f32 %v459, %v2648
  %v2650 = vpop.f32.mrf.mxu0
  %2651 = vdwg.mxu0
  %2652 = vmatpush.bf16.msra.mxu0 %v1727
  %2653 = vmatpush.bf16.msra.mxu0 %v1723
  %2654 = vmatpush.bf16.msra.mxu0 %v1719
  %2655 = vmatpush.bf16.msra.mxu0 %v1715
  %2656 = vmatpush.bf16.msra.mxu0 %v1711
  %2657 = vmatpush.bf16.msra.mxu0 %v1707
  %2658 = vmatpush.bf16.msra.mxu0 %v1703
  %2659 = vmatpush.bf16.msra.mxu0 %v1699
  %2660 = vmatmul.bf16.gmra.mxu0 %v44
  %v2661 = vpop.f32.mrf.mxu0
  %v2662 = vadd.f32 %v2649, %v2661
  %v2663 = vpop.f32.mrf.mxu0
  %2664 = vdwg.mxu0
  %2665 = vmatpush.bf16.msra.mxu0 %v1759
  %2666 = vmatpush.bf16.msra.mxu0 %v1755
  %2667 = vmatpush.bf16.msra.mxu0 %v1751
  %2668 = vmatpush.bf16.msra.mxu0 %v1747
  %2669 = vmatpush.bf16.msra.mxu0 %v1743
  %2670 = vmatpush.bf16.msra.mxu0 %v1739
  %2671 = vmatpush.bf16.msra.mxu0 %v1735
  %2672 = vmatpush.bf16.msra.mxu0 %v1731
  %2673 = vmatmul.bf16.gmra.mxu0 %v45
  %v2674 = vpop.f32.mrf.mxu0
  %v2675 = vadd.f32 %v2662, %v2674
  %v2676 = vpop.f32.mrf.mxu0
  %2677 = vdwg.mxu0
  %2678 = vmatpush.bf16.msra.mxu0 %v1791
  %2679 = vmatpush.bf16.msra.mxu0 %v1787
  %2680 = vmatpush.bf16.msra.mxu0 %v1783
  %2681 = vmatpush.bf16.msra.mxu0 %v1779
  %2682 = vmatpush.bf16.msra.mxu0 %v1775
  %2683 = vmatpush.bf16.msra.mxu0 %v1771
  %2684 = vmatpush.bf16.msra.mxu0 %v1767
  %2685 = vmatpush.bf16.msra.mxu0 %v1763
  %2686 = vmatmul.bf16.gmra.mxu0 %v46
  %v2687 = vpop.f32.mrf.mxu0
  %v2688 = vadd.f32 %v2675, %v2687
  %v2689 = vpop.f32.mrf.mxu0
  %2690 = vdwg.mxu0
  %2691 = vmatpush.bf16.msra.mxu0 %v1823
  %2692 = vmatpush.bf16.msra.mxu0 %v1819
  %2693 = vmatpush.bf16.msra.mxu0 %v1815
  %2694 = vmatpush.bf16.msra.mxu0 %v1811
  %2695 = vmatpush.bf16.msra.mxu0 %v1807
  %2696 = vmatpush.bf16.msra.mxu0 %v1803
  %2697 = vmatpush.bf16.msra.mxu0 %v1799
  %2698 = vmatpush.bf16.msra.mxu0 %v1795
  %2699 = vmatmul.bf16.gmra.mxu0 %v47
  %v2700 = vpop.f32.mrf.mxu0
  %v2701 = vadd.f32 %v2688, %v2700
  %v2702 = vpop.f32.mrf.mxu0
  %2703 = vdwg.mxu0
  %2704 = vmatpush.bf16.msra.mxu0 %v1855
  %2705 = vmatpush.bf16.msra.mxu0 %v1851
  %2706 = vmatpush.bf16.msra.mxu0 %v1847
  %2707 = vmatpush.bf16.msra.mxu0 %v1843
  %2708 = vmatpush.bf16.msra.mxu0 %v1839
  %2709 = vmatpush.bf16.msra.mxu0 %v1835
  %2710 = vmatpush.bf16.msra.mxu0 %v1831
  %2711 = vmatpush.bf16.msra.mxu0 %v1827
  %2712 = vmatmul.bf16.gmra.mxu0 %v48
  %v2713 = vpop.f32.mrf.mxu0
  %v2714 = vadd.f32 %v2701, %v2713
  %v2715 = vpop.f32.mrf.mxu0
  %2716 = vdwg.mxu0
  %2717 = vmatpush.bf16.msra.mxu0 %v1887
  %2718 = vmatpush.bf16.msra.mxu0 %v1883
  %2719 = vmatpush.bf16.msra.mxu0 %v1879
  %2720 = vmatpush.bf16.msra.mxu0 %v1875
  %2721 = vmatpush.bf16.msra.mxu0 %v1871
  %2722 = vmatpush.bf16.msra.mxu0 %v1867
  %2723 = vmatpush.bf16.msra.mxu0 %v1863
  %2724 = vmatpush.bf16.msra.mxu0 %v1859
  %2725 = vmatmul.bf16.gmra.mxu0 %v49
  %v2726 = vpop.f32.mrf.mxu0
  %v2727 = vadd.f32 %v2714, %v2726
  %v2728 = vpop.f32.mrf.mxu0
  %2729 = vdwg.mxu0
  %2730 = vmatpush.bf16.msra.mxu0 %v1919
  %2731 = vmatpush.bf16.msra.mxu0 %v1915
  %2732 = vmatpush.bf16.msra.mxu0 %v1911
  %2733 = vmatpush.bf16.msra.mxu0 %v1907
  %2734 = vmatpush.bf16.msra.mxu0 %v1903
  %2735 = vmatpush.bf16.msra.mxu0 %v1899
  %2736 = vmatpush.bf16.msra.mxu0 %v1895
  %2737 = vmatpush.bf16.msra.mxu0 %v1891
  %2738 = vmatmul.bf16.gmra.mxu0 %v50
  %v2739 = vpop.f32.mrf.mxu0
  %v2740 = vadd.f32 %v2727, %v2739
  %v2741 = vpop.f32.mrf.mxu0
  %2742 = vdwg.mxu0
  %2743 = vmatpush.bf16.msra.mxu0 %v1951
  %2744 = vmatpush.bf16.msra.mxu0 %v1947
  %2745 = vmatpush.bf16.msra.mxu0 %v1943
  %2746 = vmatpush.bf16.msra.mxu0 %v1939
  %2747 = vmatpush.bf16.msra.mxu0 %v1935
  %2748 = vmatpush.bf16.msra.mxu0 %v1931
  %2749 = vmatpush.bf16.msra.mxu0 %v1927
  %2750 = vmatpush.bf16.msra.mxu0 %v1923
  %2751 = vmatmul.bf16.gmra.mxu0 %v51
  %v2752 = vpop.f32.mrf.mxu0
  %v2753 = vadd.f32 %v2740, %v2752
  %v2754 = vpop.f32.mrf.mxu0
  %2755 = vdwg.mxu0
  %2756 = vmatpush.bf16.msra.mxu0 %v1983
  %2757 = vmatpush.bf16.msra.mxu0 %v1979
  %2758 = vmatpush.bf16.msra.mxu0 %v1975
  %2759 = vmatpush.bf16.msra.mxu0 %v1971
  %2760 = vmatpush.bf16.msra.mxu0 %v1967
  %2761 = vmatpush.bf16.msra.mxu0 %v1963
  %2762 = vmatpush.bf16.msra.mxu0 %v1959
  %2763 = vmatpush.bf16.msra.mxu0 %v1955
  %2764 = vmatmul.bf16.gmra.mxu0 %v52
  %v2765 = vpop.f32.mrf.mxu0
  %v2766 = vadd.f32 %v2753, %v2765
  %v2767 = vpop.f32.mrf.mxu0
  %2768 = vdwg.mxu0
  %2769 = vmatpush.bf16.msra.mxu0 %v2015
  %2770 = vmatpush.bf16.msra.mxu0 %v2011
  %2771 = vmatpush.bf16.msra.mxu0 %v2007
  %2772 = vmatpush.bf16.msra.mxu0 %v2003
  %2773 = vmatpush.bf16.msra.mxu0 %v1999
  %2774 = vmatpush.bf16.msra.mxu0 %v1995
  %2775 = vmatpush.bf16.msra.mxu0 %v1991
  %2776 = vmatpush.bf16.msra.mxu0 %v1987
  %2777 = vmatmul.bf16.gmra.mxu0 %v53
  %v2778 = vpop.f32.mrf.mxu0
  %v2779 = vadd.f32 %v2766, %v2778
  %v2780 = vpop.f32.mrf.mxu0
  %2781 = vdwg.mxu0
  %2782 = vmatpush.bf16.msra.mxu0 %v2047
  %2783 = vmatpush.bf16.msra.mxu0 %v2043
  %2784 = vmatpush.bf16.msra.mxu0 %v2039
  %2785 = vmatpush.bf16.msra.mxu0 %v2035
  %2786 = vmatpush.bf16.msra.mxu0 %v2031
  %2787 = vmatpush.bf16.msra.mxu0 %v2027
  %2788 = vmatpush.bf16.msra.mxu0 %v2023
  %2789 = vmatpush.bf16.msra.mxu0 %v2019
  %2790 = vmatmul.bf16.gmra.mxu0 %v54
  %v2791 = vpop.f32.mrf.mxu0
  %v2792 = vadd.f32 %v2779, %v2791
  %v2793 = vpop.f32.mrf.mxu0
  %2794 = vdwg.mxu0
  %2795 = vmatpush.bf16.msra.mxu0 0
  %2796 = vmatpush.bf16.msra.mxu0 0
  %2797 = vmatpush.bf16.msra.mxu0 0
  %2798 = vmatpush.bf16.msra.mxu0 0
  %2799 = vmatpush.bf16.msra.mxu0 %v2063
  %2800 = vmatpush.bf16.msra.mxu0 %v2059
  %2801 = vmatpush.bf16.msra.mxu0 %v2055
  %2802 = vmatpush.bf16.msra.mxu0 %v2051
  %2803 = vmatmul.bf16.gmra.mxu0 %v2468
  %v2804 = vpop.f32.mrf.mxu0
  %v2805 = vadd.f32 %v2792, %v2804
  %v2806 = vpop.f32.mrf.mxu0
  %2807 = vdwg.mxu0
  %2808 = vmatpush.bf16.msra.mxu0 %v1696
  %2809 = vmatpush.bf16.msra.mxu0 %v1692
  %2810 = vmatpush.bf16.msra.mxu0 %v1688
  %2811 = vmatpush.bf16.msra.mxu0 %v1684
  %2812 = vmatpush.bf16.msra.mxu0 %v1680
  %2813 = vmatpush.bf16.msra.mxu0 %v1676
  %2814 = vmatpush.bf16.msra.mxu0 %v1672
  %2815 = vmatpush.bf16.msra.mxu0 %v1668
  %2816 = vmatmul.bf16.gmra.mxu0 %v43
  %v2817 = vpop.f32.mrf.mxu0
  %v2818 = vadd.f32 %v460, %v2817
  %v2819 = vpop.f32.mrf.mxu0
  %2820 = vdwg.mxu0
  %2821 = vmatpush.bf16.msra.mxu0 %v1728
  %2822 = vmatpush.bf16.msra.mxu0 %v1724
  %2823 = vmatpush.bf16.msra.mxu0 %v1720
  %2824 = vmatpush.bf16.msra.mxu0 %v1716
  %2825 = vmatpush.bf16.msra.mxu0 %v1712
  %2826 = vmatpush.bf16.msra.mxu0 %v1708
  %2827 = vmatpush.bf16.msra.mxu0 %v1704
  %2828 = vmatpush.bf16.msra.mxu0 %v1700
  %2829 = vmatmul.bf16.gmra.mxu0 %v44
  %v2830 = vpop.f32.mrf.mxu0
  %v2831 = vadd.f32 %v2818, %v2830
  %v2832 = vpop.f32.mrf.mxu0
  %2833 = vdwg.mxu0
  %2834 = vmatpush.bf16.msra.mxu0 %v1760
  %2835 = vmatpush.bf16.msra.mxu0 %v1756
  %2836 = vmatpush.bf16.msra.mxu0 %v1752
  %2837 = vmatpush.bf16.msra.mxu0 %v1748
  %2838 = vmatpush.bf16.msra.mxu0 %v1744
  %2839 = vmatpush.bf16.msra.mxu0 %v1740
  %2840 = vmatpush.bf16.msra.mxu0 %v1736
  %2841 = vmatpush.bf16.msra.mxu0 %v1732
  %2842 = vmatmul.bf16.gmra.mxu0 %v45
  %v2843 = vpop.f32.mrf.mxu0
  %v2844 = vadd.f32 %v2831, %v2843
  %v2845 = vpop.f32.mrf.mxu0
  %2846 = vdwg.mxu0
  %2847 = vmatpush.bf16.msra.mxu0 %v1792
  %2848 = vmatpush.bf16.msra.mxu0 %v1788
  %2849 = vmatpush.bf16.msra.mxu0 %v1784
  %2850 = vmatpush.bf16.msra.mxu0 %v1780
  %2851 = vmatpush.bf16.msra.mxu0 %v1776
  %2852 = vmatpush.bf16.msra.mxu0 %v1772
  %2853 = vmatpush.bf16.msra.mxu0 %v1768
  %2854 = vmatpush.bf16.msra.mxu0 %v1764
  %2855 = vmatmul.bf16.gmra.mxu0 %v46
  %v2856 = vpop.f32.mrf.mxu0
  %v2857 = vadd.f32 %v2844, %v2856
  %v2858 = vpop.f32.mrf.mxu0
  %2859 = vdwg.mxu0
  %2860 = vmatpush.bf16.msra.mxu0 %v1824
  %2861 = vmatpush.bf16.msra.mxu0 %v1820
  %2862 = vmatpush.bf16.msra.mxu0 %v1816
  %2863 = vmatpush.bf16.msra.mxu0 %v1812
  %2864 = vmatpush.bf16.msra.mxu0 %v1808
  %2865 = vmatpush.bf16.msra.mxu0 %v1804
  %2866 = vmatpush.bf16.msra.mxu0 %v1800
  %2867 = vmatpush.bf16.msra.mxu0 %v1796
  %2868 = vmatmul.bf16.gmra.mxu0 %v47
  %v2869 = vpop.f32.mrf.mxu0
  %v2870 = vadd.f32 %v2857, %v2869
  %v2871 = vpop.f32.mrf.mxu0
  %2872 = vdwg.mxu0
  %2873 = vmatpush.bf16.msra.mxu0 %v1856
  %2874 = vmatpush.bf16.msra.mxu0 %v1852
  %2875 = vmatpush.bf16.msra.mxu0 %v1848
  %2876 = vmatpush.bf16.msra.mxu0 %v1844
  %2877 = vmatpush.bf16.msra.mxu0 %v1840
  %2878 = vmatpush.bf16.msra.mxu0 %v1836
  %2879 = vmatpush.bf16.msra.mxu0 %v1832
  %2880 = vmatpush.bf16.msra.mxu0 %v1828
  %2881 = vmatmul.bf16.gmra.mxu0 %v48
  %v2882 = vpop.f32.mrf.mxu0
  %v2883 = vadd.f32 %v2870, %v2882
  %v2884 = vpop.f32.mrf.mxu0
  %2885 = vdwg.mxu0
  %2886 = vmatpush.bf16.msra.mxu0 %v1888
  %2887 = vmatpush.bf16.msra.mxu0 %v1884
  %2888 = vmatpush.bf16.msra.mxu0 %v1880
  %2889 = vmatpush.bf16.msra.mxu0 %v1876
  %2890 = vmatpush.bf16.msra.mxu0 %v1872
  %2891 = vmatpush.bf16.msra.mxu0 %v1868
  %2892 = vmatpush.bf16.msra.mxu0 %v1864
  %2893 = vmatpush.bf16.msra.mxu0 %v1860
  %2894 = vmatmul.bf16.gmra.mxu0 %v49
  %v2895 = vpop.f32.mrf.mxu0
  %v2896 = vadd.f32 %v2883, %v2895
  %v2897 = vpop.f32.mrf.mxu0
  %2898 = vdwg.mxu0
  %2899 = vmatpush.bf16.msra.mxu0 %v1920
  %2900 = vmatpush.bf16.msra.mxu0 %v1916
  %2901 = vmatpush.bf16.msra.mxu0 %v1912
  %2902 = vmatpush.bf16.msra.mxu0 %v1908
  %2903 = vmatpush.bf16.msra.mxu0 %v1904
  %2904 = vmatpush.bf16.msra.mxu0 %v1900
  %2905 = vmatpush.bf16.msra.mxu0 %v1896
  %2906 = vmatpush.bf16.msra.mxu0 %v1892
  %2907 = vmatmul.bf16.gmra.mxu0 %v50
  %v2908 = vpop.f32.mrf.mxu0
  %v2909 = vadd.f32 %v2896, %v2908
  %v2910 = vpop.f32.mrf.mxu0
  %2911 = vdwg.mxu0
  %2912 = vmatpush.bf16.msra.mxu0 %v1952
  %2913 = vmatpush.bf16.msra.mxu0 %v1948
  %2914 = vmatpush.bf16.msra.mxu0 %v1944
  %2915 = vmatpush.bf16.msra.mxu0 %v1940
  %2916 = vmatpush.bf16.msra.mxu0 %v1936
  %2917 = vmatpush.bf16.msra.mxu0 %v1932
  %2918 = vmatpush.bf16.msra.mxu0 %v1928
  %2919 = vmatpush.bf16.msra.mxu0 %v1924
  %2920 = vmatmul.bf16.gmra.mxu0 %v51
  %v2921 = vpop.f32.mrf.mxu0
  %v2922 = vadd.f32 %v2909, %v2921
  %v2923 = vpop.f32.mrf.mxu0
  %2924 = vdwg.mxu0
  %2925 = vmatpush.bf16.msra.mxu0 %v1984
  %2926 = vmatpush.bf16.msra.mxu0 %v1980
  %2927 = vmatpush.bf16.msra.mxu0 %v1976
  %2928 = vmatpush.bf16.msra.mxu0 %v1972
  %2929 = vmatpush.bf16.msra.mxu0 %v1968
  %2930 = vmatpush.bf16.msra.mxu0 %v1964
  %2931 = vmatpush.bf16.msra.mxu0 %v1960
  %2932 = vmatpush.bf16.msra.mxu0 %v1956
  %2933 = vmatmul.bf16.gmra.mxu0 %v52
  %v2934 = vpop.f32.mrf.mxu0
  %v2935 = vadd.f32 %v2922, %v2934
  %v2936 = vpop.f32.mrf.mxu0
  %2937 = vdwg.mxu0
  %2938 = vmatpush.bf16.msra.mxu0 %v2016
  %2939 = vmatpush.bf16.msra.mxu0 %v2012
  %2940 = vmatpush.bf16.msra.mxu0 %v2008
  %2941 = vmatpush.bf16.msra.mxu0 %v2004
  %2942 = vmatpush.bf16.msra.mxu0 %v2000
  %2943 = vmatpush.bf16.msra.mxu0 %v1996
  %2944 = vmatpush.bf16.msra.mxu0 %v1992
  %2945 = vmatpush.bf16.msra.mxu0 %v1988
  %2946 = vmatmul.bf16.gmra.mxu0 %v53
  %v2947 = vpop.f32.mrf.mxu0
  %v2948 = vadd.f32 %v2935, %v2947
  %v2949 = vpop.f32.mrf.mxu0
  %2950 = vdwg.mxu0
  %2951 = vmatpush.bf16.msra.mxu0 %v2048
  %2952 = vmatpush.bf16.msra.mxu0 %v2044
  %2953 = vmatpush.bf16.msra.mxu0 %v2040
  %2954 = vmatpush.bf16.msra.mxu0 %v2036
  %2955 = vmatpush.bf16.msra.mxu0 %v2032
  %2956 = vmatpush.bf16.msra.mxu0 %v2028
  %2957 = vmatpush.bf16.msra.mxu0 %v2024
  %2958 = vmatpush.bf16.msra.mxu0 %v2020
  %2959 = vmatmul.bf16.gmra.mxu0 %v54
  %v2960 = vpop.f32.mrf.mxu0
  %v2961 = vadd.f32 %v2948, %v2960
  %v2962 = vpop.f32.mrf.mxu0
  %2963 = vdwg.mxu0
  %2964 = vmatpush.bf16.msra.mxu0 0
  %2965 = vmatpush.bf16.msra.mxu0 0
  %2966 = vmatpush.bf16.msra.mxu0 0
  %2967 = vmatpush.bf16.msra.mxu0 0
  %2968 = vmatpush.bf16.msra.mxu0 %v2064
  %2969 = vmatpush.bf16.msra.mxu0 %v2060
  %2970 = vmatpush.bf16.msra.mxu0 %v2056
  %2971 = vmatpush.bf16.msra.mxu0 %v2052
  %2972 = vmatmul.bf16.gmra.mxu0 %v2468
  %v2973 = vpop.f32.mrf.mxu0
  %v2974 = vadd.f32 %v2961, %v2973
  %v2975 = vpop.f32.mrf.mxu0
  %2976 = vdwg.mxu0
  %2977 = vmatpush.bf16.msra.mxu0 %v1697
  %2978 = vmatpush.bf16.msra.mxu0 %v1693
  %2979 = vmatpush.bf16.msra.mxu0 %v1689
  %2980 = vmatpush.bf16.msra.mxu0 %v1685
  %2981 = vmatpush.bf16.msra.mxu0 %v1681
  %2982 = vmatpush.bf16.msra.mxu0 %v1677
  %2983 = vmatpush.bf16.msra.mxu0 %v1673
  %2984 = vmatpush.bf16.msra.mxu0 %v1669
  %2985 = vmatmul.bf16.gmra.mxu0 %v43
  %v2986 = vpop.f32.mrf.mxu0
  %v2987 = vadd.f32 %v461, %v2986
  %v2988 = vpop.f32.mrf.mxu0
  %2989 = vdwg.mxu0
  %2990 = vmatpush.bf16.msra.mxu0 %v1729
  %2991 = vmatpush.bf16.msra.mxu0 %v1725
  %2992 = vmatpush.bf16.msra.mxu0 %v1721
  %2993 = vmatpush.bf16.msra.mxu0 %v1717
  %2994 = vmatpush.bf16.msra.mxu0 %v1713
  %2995 = vmatpush.bf16.msra.mxu0 %v1709
  %2996 = vmatpush.bf16.msra.mxu0 %v1705
  %2997 = vmatpush.bf16.msra.mxu0 %v1701
  %2998 = vmatmul.bf16.gmra.mxu0 %v44
  %v2999 = vpop.f32.mrf.mxu0
  %v3000 = vadd.f32 %v2987, %v2999
  %v3001 = vpop.f32.mrf.mxu0
  %3002 = vdwg.mxu0
  %3003 = vmatpush.bf16.msra.mxu0 %v1761
  %3004 = vmatpush.bf16.msra.mxu0 %v1757
  %3005 = vmatpush.bf16.msra.mxu0 %v1753
  %3006 = vmatpush.bf16.msra.mxu0 %v1749
  %3007 = vmatpush.bf16.msra.mxu0 %v1745
  %3008 = vmatpush.bf16.msra.mxu0 %v1741
  %3009 = vmatpush.bf16.msra.mxu0 %v1737
  %3010 = vmatpush.bf16.msra.mxu0 %v1733
  %3011 = vmatmul.bf16.gmra.mxu0 %v45
  %v3012 = vpop.f32.mrf.mxu0
  %v3013 = vadd.f32 %v3000, %v3012
  %v3014 = vpop.f32.mrf.mxu0
  %3015 = vdwg.mxu0
  %3016 = vmatpush.bf16.msra.mxu0 %v1793
  %3017 = vmatpush.bf16.msra.mxu0 %v1789
  %3018 = vmatpush.bf16.msra.mxu0 %v1785
  %3019 = vmatpush.bf16.msra.mxu0 %v1781
  %3020 = vmatpush.bf16.msra.mxu0 %v1777
  %3021 = vmatpush.bf16.msra.mxu0 %v1773
  %3022 = vmatpush.bf16.msra.mxu0 %v1769
  %3023 = vmatpush.bf16.msra.mxu0 %v1765
  %3024 = vmatmul.bf16.gmra.mxu0 %v46
  %v3025 = vpop.f32.mrf.mxu0
  %v3026 = vadd.f32 %v3013, %v3025
  %v3027 = vpop.f32.mrf.mxu0
  %3028 = vdwg.mxu0
  %3029 = vmatpush.bf16.msra.mxu0 %v1825
  %3030 = vmatpush.bf16.msra.mxu0 %v1821
  %3031 = vmatpush.bf16.msra.mxu0 %v1817
  %3032 = vmatpush.bf16.msra.mxu0 %v1813
  %3033 = vmatpush.bf16.msra.mxu0 %v1809
  %3034 = vmatpush.bf16.msra.mxu0 %v1805
  %3035 = vmatpush.bf16.msra.mxu0 %v1801
  %3036 = vmatpush.bf16.msra.mxu0 %v1797
  %3037 = vmatmul.bf16.gmra.mxu0 %v47
  %v3038 = vpop.f32.mrf.mxu0
  %v3039 = vadd.f32 %v3026, %v3038
  %v3040 = vpop.f32.mrf.mxu0
  %3041 = vdwg.mxu0
  %3042 = vmatpush.bf16.msra.mxu0 %v1857
  %3043 = vmatpush.bf16.msra.mxu0 %v1853
  %3044 = vmatpush.bf16.msra.mxu0 %v1849
  %3045 = vmatpush.bf16.msra.mxu0 %v1845
  %3046 = vmatpush.bf16.msra.mxu0 %v1841
  %3047 = vmatpush.bf16.msra.mxu0 %v1837
  %3048 = vmatpush.bf16.msra.mxu0 %v1833
  %3049 = vmatpush.bf16.msra.mxu0 %v1829
  %3050 = vmatmul.bf16.gmra.mxu0 %v48
  %v3051 = vpop.f32.mrf.mxu0
  %v3052 = vadd.f32 %v3039, %v3051
  %v3053 = vpop.f32.mrf.mxu0
  %3054 = vdwg.mxu0
  %3055 = vmatpush.bf16.msra.mxu0 %v1889
  %3056 = vmatpush.bf16.msra.mxu0 %v1885
  %3057 = vmatpush.bf16.msra.mxu0 %v1881
  %3058 = vmatpush.bf16.msra.mxu0 %v1877
  %3059 = vmatpush.bf16.msra.mxu0 %v1873
  %3060 = vmatpush.bf16.msra.mxu0 %v1869
  %3061 = vmatpush.bf16.msra.mxu0 %v1865
  %3062 = vmatpush.bf16.msra.mxu0 %v1861
  %3063 = vmatmul.bf16.gmra.mxu0 %v49
  %v3064 = vpop.f32.mrf.mxu0
  %v3065 = vadd.f32 %v3052, %v3064
  %v3066 = vpop.f32.mrf.mxu0
  %3067 = vdwg.mxu0
  %3068 = vmatpush.bf16.msra.mxu0 %v1921
  %3069 = vmatpush.bf16.msra.mxu0 %v1917
  %3070 = vmatpush.bf16.msra.mxu0 %v1913
  %3071 = vmatpush.bf16.msra.mxu0 %v1909
  %3072 = vmatpush.bf16.msra.mxu0 %v1905
  %3073 = vmatpush.bf16.msra.mxu0 %v1901
  %3074 = vmatpush.bf16.msra.mxu0 %v1897
  %3075 = vmatpush.bf16.msra.mxu0 %v1893
  %3076 = vmatmul.bf16.gmra.mxu0 %v50
  %v3077 = vpop.f32.mrf.mxu0
  %v3078 = vadd.f32 %v3065, %v3077
  %v3079 = vpop.f32.mrf.mxu0
  %3080 = vdwg.mxu0
  %3081 = vmatpush.bf16.msra.mxu0 %v1953
  %3082 = vmatpush.bf16.msra.mxu0 %v1949
  %3083 = vmatpush.bf16.msra.mxu0 %v1945
  %3084 = vmatpush.bf16.msra.mxu0 %v1941
  %3085 = vmatpush.bf16.msra.mxu0 %v1937
  %3086 = vmatpush.bf16.msra.mxu0 %v1933
  %3087 = vmatpush.bf16.msra.mxu0 %v1929
  %3088 = vmatpush.bf16.msra.mxu0 %v1925
  %3089 = vmatmul.bf16.gmra.mxu0 %v51
  %v3090 = vpop.f32.mrf.mxu0
  %v3091 = vadd.f32 %v3078, %v3090
  %v3092 = vpop.f32.mrf.mxu0
  %3093 = vdwg.mxu0
  %3094 = vmatpush.bf16.msra.mxu0 %v1985
  %3095 = vmatpush.bf16.msra.mxu0 %v1981
  %3096 = vmatpush.bf16.msra.mxu0 %v1977
  %3097 = vmatpush.bf16.msra.mxu0 %v1973
  %3098 = vmatpush.bf16.msra.mxu0 %v1969
  %3099 = vmatpush.bf16.msra.mxu0 %v1965
  %3100 = vmatpush.bf16.msra.mxu0 %v1961
  %3101 = vmatpush.bf16.msra.mxu0 %v1957
  %3102 = vmatmul.bf16.gmra.mxu0 %v52
  %v3103 = vpop.f32.mrf.mxu0
  %v3104 = vadd.f32 %v3091, %v3103
  %v3105 = vpop.f32.mrf.mxu0
  %3106 = vdwg.mxu0
  %3107 = vmatpush.bf16.msra.mxu0 %v2017
  %3108 = vmatpush.bf16.msra.mxu0 %v2013
  %3109 = vmatpush.bf16.msra.mxu0 %v2009
  %3110 = vmatpush.bf16.msra.mxu0 %v2005
  %3111 = vmatpush.bf16.msra.mxu0 %v2001
  %3112 = vmatpush.bf16.msra.mxu0 %v1997
  %3113 = vmatpush.bf16.msra.mxu0 %v1993
  %3114 = vmatpush.bf16.msra.mxu0 %v1989
  %3115 = vmatmul.bf16.gmra.mxu0 %v53
  %v3116 = vpop.f32.mrf.mxu0
  %v3117 = vadd.f32 %v3104, %v3116
  %v3118 = vpop.f32.mrf.mxu0
  %3119 = vdwg.mxu0
  %3120 = vmatpush.bf16.msra.mxu0 %v2049
  %3121 = vmatpush.bf16.msra.mxu0 %v2045
  %3122 = vmatpush.bf16.msra.mxu0 %v2041
  %3123 = vmatpush.bf16.msra.mxu0 %v2037
  %3124 = vmatpush.bf16.msra.mxu0 %v2033
  %3125 = vmatpush.bf16.msra.mxu0 %v2029
  %3126 = vmatpush.bf16.msra.mxu0 %v2025
  %3127 = vmatpush.bf16.msra.mxu0 %v2021
  %3128 = vmatmul.bf16.gmra.mxu0 %v54
  %v3129 = vpop.f32.mrf.mxu0
  %v3130 = vadd.f32 %v3117, %v3129
  %v3131 = vpop.f32.mrf.mxu0
  %3132 = vdwg.mxu0
  %3133 = vmatpush.bf16.msra.mxu0 0
  %3134 = vmatpush.bf16.msra.mxu0 0
  %3135 = vmatpush.bf16.msra.mxu0 0
  %3136 = vmatpush.bf16.msra.mxu0 0
  %3137 = vmatpush.bf16.msra.mxu0 %v2065
  %3138 = vmatpush.bf16.msra.mxu0 %v2061
  %3139 = vmatpush.bf16.msra.mxu0 %v2057
  %3140 = vmatpush.bf16.msra.mxu0 %v2053
  %3141 = vmatmul.bf16.gmra.mxu0 %v2468
  %v3142 = vpop.f32.mrf.mxu0
  %v3143 = vadd.f32 %v3130, %v3142
  %v3144 = vpop.f32.mrf.mxu0
  %3145 = vdwg.mxu0
  %vm3146 = vcmp.ge.f32.partialorder %v2636, 0.0
  %vm3147 = vcmp.ge.f32.partialorder %v2805, 0.0
  %vm3148 = vcmp.ge.f32.partialorder %v2974, 0.0
  %vm3149 = vcmp.ge.f32.partialorder %v3143, 0.0
  %v3150 = vmul.f32 %v2636, 0.01
  %v3151 = vmul.f32 %v2805, 0.01
  %v3152 = vmul.f32 %v2974, 0.01
  %v3153 = vmul.f32 %v3143, 0.01
  %v3154 = vsel %vm3146, %v2636, %v3150
  %v3155 = vsel %vm3147, %v2805, %v3151
  %v3156 = vsel %vm3148, %v2974, %v3152
  %v3157 = vsel %vm3149, %v3143, %v3153
  %v3158 = vpack.c.bf16 %v3154, %v3154
  %v3159 = vpack.c.bf16 %v3155, %v3155
  %v3160 = vpack.c.bf16 %v3156, %v3156
  %v3161 = vpack.c.bf16 %v3157, %v3157
  %v3162 = vld [vmem:[%s4] sm:$0xf]
  %v3163 = vld [vmem:[%s4 + $0x4] sm:$0xf]
  %v3164 = vld [vmem:[%s4 + $0x8] sm:$0xf]
  %v3165 = vld [vmem:[%s4 + $0xc] sm:$0xf]
  %v3166 = vld [vmem:[%s4 + $0x10] sm:$0xf]
  %v3167 = vld [vmem:[%s4 + $0x14] sm:$0xf]
  %v3168 = vld [vmem:[%s4 + $0x18] sm:$0xf]
  %v3169 = vld [vmem:[%s4 + $0x1c] sm:$0xf]
  %v3170 = vld [vmem:[%s4 + $0x20] sm:$0xf]
  %v3171 = vld [vmem:[%s4 + $0x24] sm:$0xf]
  %v3172 = vld [vmem:[%s4 + $0x28] sm:$0xf]
  %v3173 = vld [vmem:[%s4 + $0x2c] sm:$0xf]
  %v3174 = vld [vmem:[%s4 + $0x30] sm:$0xf]
  %v3175 = vld [vmem:[%s4 + $0x34] sm:$0xf]
  %v3176 = vld [vmem:[%s4 + $0x38] sm:$0xf]
  %v3177 = vld [vmem:[%s4 + $0x3c] sm:$0xf]
  %v3178 = vld [vmem:[%s4 + $0x40] sm:$0xf]
  %v3179 = vld [vmem:[%s4 + $0x44] sm:$0xf]
  %v3180 = vld [vmem:[%s4 + $0x48] sm:$0xf]
  %v3181 = vld [vmem:[%s4 + $0x4c] sm:$0xf]
  %v3182 = vld [vmem:[%s4 + $0x50] sm:$0xf]
  %v3183 = vld [vmem:[%s4 + $0x54] sm:$0xf]
  %v3184 = vld [vmem:[%s4 + $0x58] sm:$0xf]
  %v3185 = vld [vmem:[%s4 + $0x5c] sm:$0xf]
  %v3186 = vld [vmem:[%s4 + $0x60] sm:$0xf]
  %v3187 = vld [vmem:[%s4 + $0x64] sm:$0xf]
  %v3188 = vld [vmem:[%s4 + $0x68] sm:$0xf]
  %v3189 = vld [vmem:[%s4 + $0x6c] sm:$0xf]
  %v3190 = vld [vmem:[%s4 + $0x70] sm:$0xf]
  %v3191 = vld [vmem:[%s4 + $0x74] sm:$0xf]
  %v3192 = vld [vmem:[%s4 + $0x78] sm:$0xf]
  %v3193 = vld [vmem:[%s4 + $0x7c] sm:$0xf]
  %v3194 = vld [vmem:[%s4 + $0x80] sm:$0xf]
  %v3195 = vld [vmem:[%s4 + $0x84] sm:$0xf]
  %v3196 = vld [vmem:[%s4 + $0x88] sm:$0xf]
  %v3197 = vld [vmem:[%s4 + $0x8c] sm:$0xf]
  %v3198 = vld [vmem:[%s4 + $0x90] sm:$0xf]
  %v3199 = vld [vmem:[%s4 + $0x94] sm:$0xf]
  %v3200 = vld [vmem:[%s4 + $0x98] sm:$0xf]
  %v3201 = vld [vmem:[%s4 + $0x9c] sm:$0xf]
  %v3202 = vld [vmem:[%s4 + $0xa0] sm:$0xf]
  %v3203 = vld [vmem:[%s4 + $0xa4] sm:$0xf]
  %v3204 = vld [vmem:[%s4 + $0xa8] sm:$0xf]
  %v3205 = vld [vmem:[%s4 + $0xac] sm:$0xf]
  %v3206 = vld [vmem:[%s4 + $0xb0] sm:$0xf]
  %v3207 = vld [vmem:[%s4 + $0xb4] sm:$0xf]
  %v3208 = vld [vmem:[%s4 + $0xb8] sm:$0xf]
  %v3209 = vld [vmem:[%s4 + $0xbc] sm:$0xf]
  %v3210 = vld [vmem:[%s4 + $0xc0] sm:$0xf]
  %v3211 = vld [vmem:[%s4 + $0xc4] sm:$0xf]
  %v3212 = vld [vmem:[%s5] sm:$0x1]
  %v3214 = vperm.slane %v3212, 0
  %v3266 = vunpack.c.l.b16 %v3162
  %v3267 = vunpack.c.l.b16 %v3163
  %v3268 = vunpack.c.l.b16 %v3164
  %v3269 = vunpack.c.l.b16 %v3165
  %v3270 = vunpack.c.l.b16 %v3166
  %v3271 = vunpack.c.l.b16 %v3167
  %v3272 = vunpack.c.l.b16 %v3168
  %v3273 = vunpack.c.l.b16 %v3169
  %v3274 = vunpack.c.l.b16 %v3170
  %v3275 = vunpack.c.l.b16 %v3171
  %v3276 = vunpack.c.l.b16 %v3172
  %v3277 = vunpack.c.l.b16 %v3173
  %v3278 = vunpack.c.l.b16 %v3174
  %v3279 = vunpack.c.l.b16 %v3175
  %v3280 = vunpack.c.l.b16 %v3176
  %v3281 = vunpack.c.l.b16 %v3177
  %v3282 = vunpack.c.l.b16 %v3178
  %v3283 = vunpack.c.l.b16 %v3179
  %v3284 = vunpack.c.l.b16 %v3180
  %v3285 = vunpack.c.l.b16 %v3181
  %v3286 = vunpack.c.l.b16 %v3182
  %v3287 = vunpack.c.l.b16 %v3183
  %v3288 = vunpack.c.l.b16 %v3184
  %v3289 = vunpack.c.l.b16 %v3185
  %v3290 = vunpack.c.l.b16 %v3186
  %v3291 = vunpack.c.l.b16 %v3187
  %v3292 = vunpack.c.l.b16 %v3188
  %v3293 = vunpack.c.l.b16 %v3189
  %v3294 = vunpack.c.l.b16 %v3190
  %v3295 = vunpack.c.l.b16 %v3191
  %v3296 = vunpack.c.l.b16 %v3192
  %v3297 = vunpack.c.l.b16 %v3193
  %v3298 = vunpack.c.l.b16 %v3194
  %v3299 = vunpack.c.l.b16 %v3195
  %v3300 = vunpack.c.l.b16 %v3196
  %v3301 = vunpack.c.l.b16 %v3197
  %v3302 = vunpack.c.l.b16 %v3198
  %v3303 = vunpack.c.l.b16 %v3199
  %v3304 = vunpack.c.l.b16 %v3200
  %v3305 = vunpack.c.l.b16 %v3201
  %v3306 = vunpack.c.l.b16 %v3202
  %v3307 = vunpack.c.l.b16 %v3203
  %v3308 = vunpack.c.l.b16 %v3204
  %v3309 = vunpack.c.l.b16 %v3205
  %v3310 = vunpack.c.l.b16 %v3206
  %v3311 = vunpack.c.l.b16 %v3207
  %v3312 = vunpack.c.l.b16 %v3208
  %v3313 = vunpack.c.l.b16 %v3209
  %v3314 = vunpack.c.l.b16 %v3210
  %v3315 = vunpack.c.l.b16 %v3211
  %v3316 = vpack.c.b16 %v3267, %v3266
  %v3317 = vpack.c.b16 %v3269, %v3268
  %v3318 = vpack.c.b16 %v3271, %v3270
  %v3319 = vpack.c.b16 %v3273, %v3272
  %v3320 = vpack.c.b16 %v3275, %v3274
  %v3321 = vpack.c.b16 %v3277, %v3276
  %v3322 = vpack.c.b16 %v3279, %v3278
  %v3323 = vpack.c.b16 %v3281, %v3280
  %v3324 = vpack.c.b16 %v3283, %v3282
  %v3325 = vpack.c.b16 %v3285, %v3284
  %v3326 = vpack.c.b16 %v3287, %v3286
  %v3327 = vpack.c.b16 %v3289, %v3288
  %v3328 = vpack.c.b16 %v3291, %v3290
  %v3329 = vpack.c.b16 %v3293, %v3292
  %v3330 = vpack.c.b16 %v3295, %v3294
  %v3331 = vpack.c.b16 %v3297, %v3296
  %v3332 = vpack.c.b16 %v3299, %v3298
  %v3333 = vpack.c.b16 %v3301, %v3300
  %v3334 = vpack.c.b16 %v3303, %v3302
  %v3335 = vpack.c.b16 %v3305, %v3304
  %v3336 = vpack.c.b16 %v3307, %v3306
  %v3337 = vpack.c.b16 %v3309, %v3308
  %v3338 = vpack.c.b16 %v3311, %v3310
  %v3339 = vpack.c.b16 %v3313, %v3312
  %v3340 = vpack.c.b16 %v3315, %v3314
  %vm3366 = vcmask 130048
  %v3368 = vsel %vm3366, %v3161, 0
  %3370 = vmatpush.bf16.msra.mxu0 %v3323
  %3371 = vmatpush.bf16.msra.mxu0 %v3322
  %3372 = vmatpush.bf16.msra.mxu0 %v3321
  %3373 = vmatpush.bf16.msra.mxu0 %v3320
  %3374 = vmatpush.bf16.msra.mxu0 %v3319
  %3375 = vmatpush.bf16.msra.mxu0 %v3318
  %3376 = vmatpush.bf16.msra.mxu0 %v3317
  %3377 = vmatpush.bf16.msra.mxu0 %v3316
  %3378 = vmatmul.bf16.gmra.mxu0 %v3158
  %v3379 = vpop.f32.mrf.mxu0
  %v3380 = vadd.f32 %v3214, %v3379
  %v3381 = vpop.f32.mrf.mxu0
  %3382 = vdwg.mxu0
  %3383 = vmatpush.bf16.msra.mxu0 %v3331
  %3384 = vmatpush.bf16.msra.mxu0 %v3330
  %3385 = vmatpush.bf16.msra.mxu0 %v3329
  %3386 = vmatpush.bf16.msra.mxu0 %v3328
  %3387 = vmatpush.bf16.msra.mxu0 %v3327
  %3388 = vmatpush.bf16.msra.mxu0 %v3326
  %3389 = vmatpush.bf16.msra.mxu0 %v3325
  %3390 = vmatpush.bf16.msra.mxu0 %v3324
  %3391 = vmatmul.bf16.gmra.mxu0 %v3159
  %v3392 = vpop.f32.mrf.mxu0
  %v3393 = vadd.f32 %v3380, %v3392
  %v3394 = vpop.f32.mrf.mxu0
  %3395 = vdwg.mxu0
  %3396 = vmatpush.bf16.msra.mxu0 %v3339
  %3397 = vmatpush.bf16.msra.mxu0 %v3338
  %3398 = vmatpush.bf16.msra.mxu0 %v3337
  %3399 = vmatpush.bf16.msra.mxu0 %v3336
  %3400 = vmatpush.bf16.msra.mxu0 %v3335
  %3401 = vmatpush.bf16.msra.mxu0 %v3334
  %3402 = vmatpush.bf16.msra.mxu0 %v3333
  %3403 = vmatpush.bf16.msra.mxu0 %v3332
  %3404 = vmatmul.bf16.gmra.mxu0 %v3160
  %v3405 = vpop.f32.mrf.mxu0
  %v3406 = vadd.f32 %v3393, %v3405
  %v3407 = vpop.f32.mrf.mxu0
  %3408 = vdwg.mxu0
  %3409 = vmatpush.bf16.msra.mxu0 0
  %3410 = vmatpush.bf16.msra.mxu0 0
  %3411 = vmatpush.bf16.msra.mxu0 0
  %3412 = vmatpush.bf16.msra.mxu0 0
  %3413 = vmatpush.bf16.msra.mxu0 0
  %3414 = vmatpush.bf16.msra.mxu0 0
  %3415 = vmatpush.bf16.msra.mxu0 0
  %3416 = vmatpush.bf16.msra.mxu0 %v3340
  %3417 = vmatmul.bf16.gmra.mxu0 %v3368
  %v3418 = vpop.f32.mrf.mxu0
  %v3419 = vadd.f32 %v3406, %v3418
  %v3420 = vpop.f32.mrf.mxu0
  %3421 = vdwg.mxu0
  %vm3422 = vcmp.ge.f32.partialorder %v3419, 0.0
  %v3423 = vmul.f32 %v3419, 0.01
  %v3424 = vsel %vm3422, %v3419, %v3423
  %v3425 = vpack.c.bf16 %v3424, %v3424
  %v3426 = vld [vmem:[%s6] sm:$0xf]
  %v3427 = vld [vmem:[%s6 + $0x4] sm:$0xf]
  %v3428 = vld [vmem:[%s6 + $0x8] sm:$0xf]
  %v3429 = vld [vmem:[%s6 + $0xc] sm:$0xf]
  %v3430 = vld [vmem:[%s6 + $0x10] sm:$0xf]
  %v3431 = vld [vmem:[%s6 + $0x14] sm:$0xf]
  %v3432 = vld [vmem:[%s6 + $0x18] sm:$0xf]
  %v3433 = vld [vmem:[%s6 + $0x1c] sm:$0xf]
  %v3434 = vld [vmem:[%s6 + $0x20] sm:$0xf]
  %v3435 = vld [vmem:[%s6 + $0x24] sm:$0xf]
  %v3436 = vld [vmem:[%s6 + $0x28] sm:$0xf]
  %v3437 = vld [vmem:[%s6 + $0x2c] sm:$0xf]
  %v3438 = vld [vmem:[%s6 + $0x30] sm:$0xf]
  %v3439 = vld [vmem:[%s6 + $0x34] sm:$0xf]
  %v3440 = vld [vmem:[%s6 + $0x38] sm:$0xf]
  %v3441 = vld [vmem:[%s6 + $0x3c] sm:$0xf]
  %v3442 = vld [vmem:[%s7] sm:$0x1]
  %v3444 = vperm.slane %v3442, 0
  %v3462 = vunpack.c.l.b16 %v3426
  %v3463 = vunpack.c.l.b16 %v3427
  %v3464 = vunpack.c.l.b16 %v3428
  %v3465 = vunpack.c.l.b16 %v3429
  %v3466 = vunpack.c.l.b16 %v3430
  %v3467 = vunpack.c.l.b16 %v3431
  %v3468 = vunpack.c.l.b16 %v3432
  %v3469 = vunpack.c.l.b16 %v3433
  %v3470 = vunpack.c.l.b16 %v3434
  %v3471 = vunpack.c.l.b16 %v3435
  %v3472 = vunpack.c.l.b16 %v3436
  %v3473 = vunpack.c.l.b16 %v3437
  %v3474 = vunpack.c.l.b16 %v3438
  %v3475 = vunpack.c.l.b16 %v3439
  %v3476 = vunpack.c.l.b16 %v3440
  %v3477 = vunpack.c.l.b16 %v3441
  %v3478 = vpack.c.b16 %v3463, %v3462
  %v3479 = vpack.c.b16 %v3465, %v3464
  %v3480 = vpack.c.b16 %v3467, %v3466
  %v3481 = vpack.c.b16 %v3469, %v3468
  %v3482 = vpack.c.b16 %v3471, %v3470
  %v3483 = vpack.c.b16 %v3473, %v3472
  %v3484 = vpack.c.b16 %v3475, %v3474
  %v3485 = vpack.c.b16 %v3477, %v3476
  %3494 = vmatpush.bf16.msra.mxu0 %v3485
  %3495 = vmatpush.bf16.msra.mxu0 %v3484
  %3496 = vmatpush.bf16.msra.mxu0 %v3483
  %3497 = vmatpush.bf16.msra.mxu0 %v3482
  %3498 = vmatpush.bf16.msra.mxu0 %v3481
  %3499 = vmatpush.bf16.msra.mxu0 %v3480
  %3500 = vmatpush.bf16.msra.mxu0 %v3479
  %3501 = vmatpush.bf16.msra.mxu0 %v3478
  %3502 = vmatmul.bf16.gmra.mxu0 %v3425
  %v3503 = vpop.f32.mrf.mxu0
  %v3504 = vadd.f32 %v3444, %v3503
  %v3505 = vpop.f32.mrf.mxu0
  %3506 = vdwg.mxu0
  %v3507 = vtanh.pop %v3504
  %v3508 = vld [vmem:[%s1] sm:$0xff]
  %v3509 = vmul.f32 %v3507, %v3508
  %vm3510 = vcmask 261120
  %v3511 = vsel %vm3510, %v3509, 0.0
  %3512 = vadd.xlane.f32.xlu0 %v3511
  %v3513 = vpop.xlane.xlu0 %3512
  %vm3514 = vcmask 7168
  %3515 = vst.msk [vmem:[%s8] sm:$0xff] %vm3514, %v3513
  // Predicated region
  $region34: #{receiver_forward.1} parent=0 // pred_check
    _
  $region35: #{receiver_forward.1} parent=0 // pred_check_branch
    %3517 = sbr.rel (0) target = $region37
  $region36: #{receiver_forward.1} parent=0 // pred_region
    _
  $region37: #{receiver_forward.1} parent=0 // pred_fallthru
    _
  // Predicated region
  $region38: #{receiver_forward.1} parent=0 // pred_check
    _
  $region39: #{receiver_forward.1} parent=0 // pred_check_branch
    %3519 = sbr.rel (0) target = $region41
  $region40: #{receiver_forward.1} parent=0 // pred_region
    _
  $region41: #{receiver_forward.1} parent=0 // pred_fallthru
    _

</llo_original>
